<compile_context>
chip_gen: v5e
topology: v5e:2x2
jax: 0.10.0
libtpu: 0.0.40
codegen_flags: <defaults>
</compile_context>

<pallas_src>
import functools

import jax
import jax.numpy as jnp
import numpy as np
from jax.experimental import pallas as pl
from jax.experimental.pallas import tpu as pltpu


def _round_up(a, b):
    return -(-a // b) * b


# --------------------------- VMEM budget (per chip generation) ---------------------------


def _vmem_budget():
    """Generation-aware VMEM working-set budget and Mosaic scoped-VMEM limit."""
    phys = 64 * 1024 * 1024            # conservative default (v7x physical VMEM)
    try:
        info = pltpu.get_tpu_info()
        phys = int(getattr(info, "vmem_capacity_bytes", phys)) or phys
    except Exception:
        pass
    # 128 MiB parts (v5e/v6e): ~83 MiB budget / ~108 MiB limit.
    # 64  MiB parts (v7x)    : ~42 MiB budget / ~54  MiB limit.
    budget = int(phys * 0.65)
    limit = min(int(phys * 0.85), 128 * 1024 * 1024)
    return budget, limit


# ------------------------------------ Pallas kernels -------------------------------------


def _conv1d_kernel(x_ref, w_ref, b_ref, o_ref, *, groups, tl, ncl_out):
    """Strided Conv1d tile with the im2col fused into the kernel.

    x_ref : (TLg, stride*Cin)      stride-grouped overlapping input window (compute dtype)
    w_ref : (G, stride*Cin, TCout) grouped weights (compute dtype)
    b_ref : (1, TCout)             f32 bias
    o_ref : (TCout, TL) if ncl_out else (TL, TCout)
    """
    tco = w_ref.shape[-1]
    acc = jnp.zeros((tl, tco), jnp.float32)              # f32 accumulator (VMEM/vregs)
    for g in range(groups):                              # G = ceil(ksize / stride) matmuls
        xs = x_ref[pl.ds(g, tl), :]                      # (TL, stride*Cin), sublane shift g
        acc = acc + jnp.dot(xs, w_ref[g], preferred_element_type=jnp.float32)
    acc = acc + b_ref[...]
    if ncl_out:                                          # write NCL directly (XLU transpose)
        o_ref[...] = jnp.transpose(acc, (1, 0)).astype(o_ref.dtype)
    else:
        o_ref[...] = acc.astype(o_ref.dtype)


def _avgpool1d_lane_kernel(x_ref, o_ref, *, s):
    """x_ref: (TR, TLo*s) lane-dense -> o_ref: (TR, TLo); mean of s strided lane slices."""
    tlo = o_ref.shape[-1]
    acc = x_ref[:, pl.ds(0, tlo, stride=s)].astype(jnp.float32)
    for q in range(1, s):
        acc = acc + x_ref[:, pl.ds(q, tlo, stride=s)].astype(jnp.float32)
    o_ref[...] = (acc * (1.0 / s)).astype(o_ref.dtype)


def _avgpool1d_3d_kernel(x_ref, o_ref):
    """Fallback: x_ref (TR, TLo, s) -> o_ref (TR, TLo); mean over the trailing window."""
    x = x_ref[...].astype(jnp.float32)
    o_ref[...] = (jnp.sum(x, axis=-1) * (1.0 / x_ref.shape[-1])).astype(o_ref.dtype)


# ------------------------------------ tile selection -------------------------------------


def _conv_tiles(lout, cin, coutp, stride, ksize, x_isz, o_isz, budget):
    """Pick (TL, TCout): TL multiple of 128 (lane-dense NCL stores), TCout a divisor of
    Coutp in MXU-friendly granules (256 when they divide), weights VMEM-resident when
    possible, and TL never collapsing below min(256, padded lout)."""
    gran = 256 if coutp % 256 == 0 else 128
    groups = -(-ksize // stride)
    lout_cap = _round_up(lout, 128)

    def cost(tl, tco):
        tlg = _round_up(tl + groups - 1, 8)
        return (2 * tlg * stride * cin * x_isz                        # dbl-buffered input
                + 2 * (groups * stride * cin * tco * x_isz + tco * 4)  # weights + bias
                + 2 * tl * tco * o_isz                                # dbl-buffered output
                + 2 * tl * tco * 4)                                   # f32 acc / transpose

    tcos = [t for t in range(coutp, 0, -gran) if coutp % t == 0] or [coutp]

    def best_tl(tco):
        tl = min(1024, lout_cap)
        while tl > 128 and cost(tl, tco) > budget:
            tl -= 128
        return tl

    tl_floor = min(256, lout_cap)
    for tco in tcos:                                      # largest (resident) weights first
        tl = best_tl(tco)
        if cost(tl, tco) <= budget and tl >= tl_floor:
            return int(tl), int(tco)
    tco = tcos[-1]
    return int(best_tl(tco)), int(tco)


# -------------------------------------- JAX wrappers --------------------------------------


def downsample_conv(x, weight, bias, *, factor=4, ksize=5, pad=2,
                    compute_dtype=jnp.bfloat16, out_layout="NCL"):
    """nn.Conv1d(channels, out_channels, ksize, stride=factor, padding=pad) on NCL x."""
    n, cin, L = x.shape
    cout, wcin, wk = weight.shape
    assert wcin == cin and wk == ksize
    stride = int(factor)
    lout = (L + 2 * pad - ksize) // stride + 1
    assert lout > 0

    cdt = jnp.dtype(compute_dtype) if compute_dtype is not None else x.dtype
    odt = x.dtype
    x_isz = jnp.dtype(cdt).itemsize
    o_isz = jnp.dtype(odt).itemsize
    coutp = _round_up(cout, 128)
    groups = -(-ksize // stride)
    want_ncl = out_layout.upper() == "NCL"

    budget, vmem_limit = _vmem_budget()
    tl, tco = _conv_tiles(lout, cin, coutp, stride, ksize, x_isz, o_isz, budget)
    n_j = pl.cdiv(lout, tl)
    n_co = coutp // tco
    tlg = _round_up(tl + groups - 1, 8)                 # grouped rows per window (+halo)

    # --- wrapper-side relayout: NCL -> windowed, stride-grouped NLC (compute dtype) -----
    # xw[n, j, r, q*cin + c] == x_zero_padded[n, c, (j*tl + r)*stride + q]
    lg_total = (n_j - 1) * tl + tlg
    lp_total = lg_total * stride
    x_nlc = jnp.transpose(x, (0, 2, 1)).astype(cdt)                      # (n, L, cin)
    xp = jnp.pad(x_nlc, ((0, 0), (pad, max(0, lp_total - L - pad)), (0, 0)))
    xp = xp[:, :lp_total, :]
    xg = xp.reshape(n, lg_total, stride * cin)                           # free regroup
    if n_j == 1:
        xw = xg[:, None, :, :]
    else:
        rows = (np.arange(n_j, dtype=np.int32)[:, None] * tl
                + np.arange(tlg, dtype=np.int32)[None, :])
        xw = xg[:, rows, :]                                              # (n, n_j, tlg, s*cin)

    # weights (Cout, Cin, K) -> grouped (G, stride*Cin, Coutp); bias -> (1, Coutp) f32
    wpad = jnp.pad(weight, ((0, coutp - cout), (0, 0), (0, groups * stride - ksize)))
    wg = jnp.transpose(wpad.reshape(coutp, cin, groups, stride), (2, 3, 1, 0))
    wg = wg.reshape(groups, stride * cin, coutp).astype(cdt)
    bt = jnp.pad(bias.astype(jnp.float32).reshape(1, cout), ((0, 0), (0, coutp - cout)))

    # --- grid ordering: weight vs x residency; >1-extent leading axis for v7x megacore ---
    x_bytes = int(np.prod(xw.shape)) * x_isz
    w_bytes = int(np.prod(wg.shape)) * x_isz
    if n_co == 1 or (n_co - 1) * x_bytes <= (n * n_j - 1) * w_bytes:
        prio = ("co", "b", "j")          # weight tiles fetched exactly once
    else:
        prio = ("b", "j", "co")          # x streamed exactly once, weights re-fetched
    sizes = {"co": n_co, "b": n, "j": n_j}
    order = [a for a in prio if sizes[a] > 1] + [a for a in prio if sizes[a] == 1]
    grid = tuple(sizes[a] for a in order)
    ico, ib, ij = order.index("co"), order.index("b"), order.index("j")
    weights_static = (prio[0] == "co")   # weight/bias block constant across inner axes

    x_map = lambda *g: (g[ib], g[ij], 0, 0)
    w_map = lambda *g: (0, 0, g[ico])
    bias_map = lambda *g: (0, g[ico])
    o_map_ncl = lambda *g: (g[ib], g[ico], g[ij])
    o_map_nlc = lambda *g: (g[ib], g[ij], g[ico])

    flops = 2 * n * (n_j * tl) * (groups * stride * cin) * coutp
    bytes_accessed = (x_bytes + w_bytes + int(np.prod(bt.shape)) * 4
                      + n * coutp * n_j * tl * o_isz)

    def _call(single_buf_w, ncl_in_kernel):
        wb_kwargs = dict(pipeline_mode=pl.Buffered(1)) if single_buf_w else {}
        in_specs = [
            pl.BlockSpec((None, None, tlg, stride * cin), x_map),
            pl.BlockSpec((groups, stride * cin, tco), w_map, **wb_kwargs),
            pl.BlockSpec((1, tco), bias_map, **wb_kwargs),
        ]
        if ncl_in_kernel:
            oshape = jax.ShapeDtypeStruct((n, coutp, n_j * tl), odt)
            out_spec = pl.BlockSpec((None, tco, tl), o_map_ncl)
        else:
            oshape = jax.ShapeDtypeStruct((n, n_j * tl, coutp), odt)
            out_spec = pl.BlockSpec((None, tl, tco), o_map_nlc)
        kern = functools.partial(_conv1d_kernel, groups=groups, tl=tl,
                                 ncl_out=ncl_in_kernel)
        return pl.pallas_call(
            kern,
            out_shape=oshape,
            grid=grid,
            in_specs=in_specs,
            out_specs=out_spec,
            compiler_params=pltpu.CompilerParams(
                dimension_semantics=("parallel",) * len(grid),
                vmem_limit_bytes=vmem_limit,
            ),
            cost_estimate=pl.CostEstimate(flops=flops, transcendentals=0,
                                          bytes_accessed=bytes_accessed),
        )(xw, wg, bt)

    # Portability guard: pl.Buffered(1) single-buffering and the in-kernel NCL transpose
    # are attempted first; if the local toolchain rejects them, retry without (same math).
    attempts = []
    if weights_static:
        attempts.append((True, want_ncl))
    attempts.append((False, want_ncl))
    if want_ncl:
        attempts.append((False, False))
    out = None
    last_err = None
    used_ncl_kernel = want_ncl
    for single_buf_w, ncl_in_kernel in attempts:
        try:
            out = _call(single_buf_w, ncl_in_kernel)
            used_ncl_kernel = ncl_in_kernel
            break
        except Exception as e:          # noqa: BLE001 - fall back to the next variant
            last_err = e
    if out is None:
        raise last_err

    if want_ncl:
        if used_ncl_kernel:
            return out[:, :cout, :lout]
        return jnp.transpose(out[:, :lout, :cout], (0, 2, 1))
    return out[:, :lout, :cout]


def downsample_avgpool(x, *, factor=4):
    """nn.AvgPool1d(kernel_size=factor, stride=factor) on NCL x."""
    n, c, L = x.shape
    s = int(factor)
    lout = L // s
    assert lout > 0
    R = n * c
    isz = x.dtype.itemsize
    budget, vmem_limit = _vmem_budget()
    x2 = x[:, :, :lout * s].reshape(R, lout * s)          # free, row-major reshape

    def _call_lane():
        # Lane-dense layout: input block (TR, TLo*s), output block (TR, TLo).
        tlo = lout if lout <= 2048 else 2048              # multiple of 128 when tiled
        row_bytes = 2 * tlo * (s + 1) * isz + 3 * tlo * 4
        tr = budget // max(row_bytes, 1)
        tr = R if tr >= R else max(8, (tr // 8) * 8)
        grid = (pl.cdiv(R, tr), pl.cdiv(lout, tlo))
        return pl.pallas_call(
            functools.partial(_avgpool1d_lane_kernel, s=s),
            out_shape=jax.ShapeDtypeStruct((R, lout), x.dtype),
            grid=grid,
            in_specs=[pl.BlockSpec((tr, tlo * s), lambda i, j: (i, j))],
            out_specs=pl.BlockSpec((tr, tlo), lambda i, j: (i, j)),
            compiler_params=pltpu.CompilerParams(
                dimension_semantics=("parallel", "parallel"),
                vmem_limit_bytes=vmem_limit,
            ),
            cost_estimate=pl.CostEstimate(
                flops=R * lout * s, transcendentals=0,
                bytes_accessed=R * lout * (s + 1) * isz),
        )(x2)

    def _call_3d():
        # Proven fallback: 3-D block with the window on the (lane-padded) minor axis.
        x3 = x2.reshape(R, lout, s)
        tlo = lout if lout <= 2048 else 2048
        lane_pad = _round_up(max(s, 1), 128)
        row_bytes = 2 * _round_up(tlo, 8) * (lane_pad + 1) * isz
        tr = max(1, budget // row_bytes)
        tr = R if tr >= R else max(8, (tr // 8) * 8)
        grid = (pl.cdiv(R, tr), pl.cdiv(lout, tlo))
        return pl.pallas_call(
            _avgpool1d_3d_kernel,
            out_shape=jax.ShapeDtypeStruct((R, lout), x.dtype),
            grid=grid,
            in_specs=[pl.BlockSpec((tr, tlo, s), lambda i, j: (i, j, 0))],
            out_specs=pl.BlockSpec((tr, tlo), lambda i, j: (i, j)),
            compiler_params=pltpu.CompilerParams(
                dimension_semantics=("parallel", "parallel"),
                vmem_limit_bytes=vmem_limit,
            ),
            cost_estimate=pl.CostEstimate(
                flops=R * lout * s, transcendentals=0,
                bytes_accessed=R * lout * (s + 1) * isz),
        )(x3)

    try:
        out = _call_lane()
    except Exception:       # noqa: BLE001 - lane-strided slices unsupported -> 3-D tiles
        out = _call_3d()
    return out.reshape(n, c, lout)


def downsample(x, params, *, channels, use_conv, out_channels=None,
               factor=4, ksize=5, pad=2, compute_dtype=jnp.bfloat16, out_layout="NCL"):
    """Forward pass equivalent of the PyTorch Downsample module (NCL in, NCL out)."""
    out_channels = out_channels or channels
    assert x.shape[1] == channels
    if use_conv:
        return downsample_conv(x, params["weight"], params["bias"],
                               factor=factor, ksize=ksize, pad=pad,
                               compute_dtype=compute_dtype, out_layout=out_layout)
    assert channels == out_channels
    return downsample_avgpool(x, factor=factor)


# ------------------------------------------ demo ------------------------------------------


if __name__ == "__main__":
    N, C, L = 2, 4, 16
    factor, ksize, pad = 4, 5, 2

    key = jax.random.PRNGKey(0)
    kx, kw, kb = jax.random.split(key, 3)
    x = jax.random.normal(kx, (N, C, L), dtype=jnp.float32)
    # nn.Conv1d(C, C, ksize) weights: (Cout, Cin, K), bias: (Cout,)
    weight = 0.1 * jax.random.normal(kw, (C, C, ksize), dtype=jnp.float32)
    bias = 0.1 * jax.random.normal(kb, (C,), dtype=jnp.float32)

    y_ref = jax.lax.conv_general_dilated(
        x, weight, window_strides=(factor,), padding=[(pad, pad)],
        dimension_numbers=("NCH", "OIH", "NCH")) + bias[None, :, None]

    # --- use_conv=True, default bf16 compute (accepted tolerance ~5e-2) ---
    y_conv = downsample(x, {"weight": weight, "bias": bias},
                        channels=C, use_conv=True,
                        factor=factor, ksize=ksize, pad=pad)
    y_conv = jax.block_until_ready(y_conv)
    assert y_conv.shape == (N, C, (L + 2 * pad - ksize) // factor + 1)
    np.testing.assert_allclose(np.asarray(y_conv), np.asarray(y_ref),
                               rtol=5e-2, atol=5e-2)

    # --- use_conv=True, exact f32 compute path ---
    y_f32 = downsample(x, {"weight": weight, "bias": bias},
                       channels=C, use_conv=True,
                       factor=factor, ksize=ksize, pad=pad,
                       compute_dtype=jnp.float32)
    y_f32 = jax.block_until_ready(y_f32)
    np.testing.assert_allclose(np.asarray(y_f32), np.asarray(y_ref),
                               rtol=1e-5, atol=1e-5)

    # --- use_conv=True, NLC output layout (skips the in-kernel transpose) ---
    y_nlc = downsample(x, {"weight": weight, "bias": bias},
                       channels=C, use_conv=True,
                       factor=factor, ksize=ksize, pad=pad,
                       compute_dtype=jnp.float32, out_layout="NLC")
    y_nlc = jax.block_until_ready(y_nlc)
    np.testing.assert_allclose(np.asarray(jnp.transpose(y_nlc, (0, 2, 1))),
                               np.asarray(y_ref), rtol=1e-5, atol=1e-5)

    # --- use_conv=False (AvgPool1d) ---
    y_pool = downsample(x, {}, channels=C, use_conv=False, factor=factor)
    y_pool = jax.block_until_ready(y_pool)
    y_pool_ref = x[:, :, :(L // factor) * factor].reshape(
        N, C, L // factor, factor).mean(-1)
    np.testing.assert_allclose(np.asarray(y_pool), np.asarray(y_pool_ref),
                               rtol=1e-5, atol=1e-5)
    assert y_pool.shape == (N, C, L // factor)

    print("KERNEL_OK")
</pallas_src>

<mosaic_0001>
module attributes {stable_mosaic.version = 11 : i64} {
  func.func @_conv1d_kernel(%arg0: i32, %arg1: i32, %arg2: i32, %arg3: memref<1x1x136x16xbf16, #tpu.memory_space<vmem>>, %arg4: memref<2x16x128xbf16, #tpu.memory_space<vmem>>, %arg5: memref<1x128xf32, #tpu.memory_space<vmem>>, %arg6: memref<1x128x128xf32, #tpu.memory_space<vmem>>) attributes {dimension_semantics = [#tpu.dimension_semantics<parallel>, #tpu.dimension_semantics<parallel>, #tpu.dimension_semantics<parallel>], iteration_bounds = array<i64: 2, 1, 1>, scalar_prefetch = 0 : i64, scratch_operands = 0 : i64, tpu.core_type = #tpu.core_type<tc>, window_params = [{transform_indices = @transform_0, window_bounds = array<i64: 1, 1, 136, 16>}, {pipeline_mode = #tpu.pipeline_mode<synchronous>, transform_indices = @transform_1, window_bounds = array<i64: 2, 16, 128>}, {pipeline_mode = #tpu.pipeline_mode<synchronous>, transform_indices = @transform_2, window_bounds = array<i64: 1, 128>}, {transform_indices = @transform_3, window_bounds = array<i64: 1, 128, 128>}]} {
    %cst = arith.constant 0.000000e+00 : f32
    %0 = vector.broadcast %cst : f32 to vector<128x128xf32>
    %c0 = arith.constant 0 : index
    %c0_0 = arith.constant 0 : index
    %c0_1 = arith.constant 0 : index
    %c0_2 = arith.constant 0 : index
    %1 = vector.load %arg3[%c0, %c0_0, %c0_1, %c0_2] : memref<1x1x136x16xbf16, #tpu.memory_space<vmem>>, vector<1x1x128x16xbf16>
    %2 = vector.shape_cast %1 : vector<1x1x128x16xbf16> to vector<128x16xbf16>
    %c0_3 = arith.constant 0 : index
    %c0_4 = arith.constant 0 : index
    %c0_5 = arith.constant 0 : index
    %3 = vector.load %arg4[%c0_3, %c0_4, %c0_5] : memref<2x16x128xbf16, #tpu.memory_space<vmem>>, vector<1x16x128xbf16>
    %4 = vector.shape_cast %3 : vector<1x16x128xbf16> to vector<16x128xbf16>
    %cst_6 = arith.constant dense<0.000000e+00> : vector<128x128xf32>
    %5 = tpu.matmul %2, %4, %cst_6 {dimension_numbers = #tpu.dot_dimension_numbers<[1], [0], [0], [1], [0, 0, 1, 1], [], []>} : vector<128x16xbf16>, vector<16x128xbf16>, vector<128x128xf32> -> vector<128x128xf32>
    %6 = arith.addf %0, %5 : vector<128x128xf32>
    %c0_7 = arith.constant 0 : index
    %c0_8 = arith.constant 0 : index
    %c1 = arith.constant 1 : index
    %c0_9 = arith.constant 0 : index
    %7 = vector.load %arg3[%c0_7, %c0_8, %c1, %c0_9] : memref<1x1x136x16xbf16, #tpu.memory_space<vmem>>, vector<1x1x128x16xbf16>
    %8 = vector.shape_cast %7 : vector<1x1x128x16xbf16> to vector<128x16xbf16>
    %c1_10 = arith.constant 1 : index
    %c0_11 = arith.constant 0 : index
    %c0_12 = arith.constant 0 : index
    %9 = vector.load %arg4[%c1_10, %c0_11, %c0_12] : memref<2x16x128xbf16, #tpu.memory_space<vmem>>, vector<1x16x128xbf16>
    %10 = vector.shape_cast %9 : vector<1x16x128xbf16> to vector<16x128xbf16>
    %cst_13 = arith.constant dense<0.000000e+00> : vector<128x128xf32>
    %11 = tpu.matmul %8, %10, %cst_13 {dimension_numbers = #tpu.dot_dimension_numbers<[1], [0], [0], [1], [0, 0, 1, 1], [], []>} : vector<128x16xbf16>, vector<16x128xbf16>, vector<128x128xf32> -> vector<128x128xf32>
    %12 = arith.addf %6, %11 : vector<128x128xf32>
    %c0_14 = arith.constant 0 : index
    %c0_15 = arith.constant 0 : index
    %13 = vector.load %arg5[%c0_14, %c0_15] : memref<1x128xf32, #tpu.memory_space<vmem>>, vector<1x128xf32>
    %14 = vector.broadcast %13 : vector<1x128xf32> to vector<128x128xf32>
    %15 = arith.addf %12, %14 : vector<128x128xf32>
    %16 = tpu.transpose %15, [1, 0] : vector<128x128xf32> -> vector<128x128xf32>
    %c0_16 = arith.constant 0 : index
    %c0_17 = arith.constant 0 : index
    %c0_18 = arith.constant 0 : index
    %17 = vector.load %arg6[%c0_16, %c0_17, %c0_18] : memref<1x128x128xf32, #tpu.memory_space<vmem>>, vector<1x128x128xf32>
    %18 = vector.shape_cast %17 : vector<1x128x128xf32> to vector<128x128xf32>
    %19 = vector.shape_cast %16 : vector<128x128xf32> to vector<1x128x128xf32>
    tpu.vector_store %arg6[%c0_16, %c0_17, %c0_18], %19 {strides = array<i32>} : memref<1x128x128xf32, #tpu.memory_space<vmem>>, vector<1x128x128xf32>,
    return
  }
  func.func @transform_0(%arg0: i32, %arg1: i32, %arg2: i32) -> (i32, i32, i32, i32) {
    %c0_i32 = arith.constant 0 : i32
    %c0_i32_0 = arith.constant 0 : i32
    %c0_i32_1 = arith.constant 0 : i32
    return %arg0, %arg2, %c0_i32, %c0_i32_0 : i32, i32, i32, i32
  }
  func.func @transform_1(%arg0: i32, %arg1: i32, %arg2: i32) -> (i32, i32, i32) {
    %c0_i32 = arith.constant 0 : i32
    %c0_i32_0 = arith.constant 0 : i32
    %c0_i32_1 = arith.constant 0 : i32
    return %c0_i32, %c0_i32_0, %arg1 : i32, i32, i32
  }
  func.func @transform_2(%arg0: i32, %arg1: i32, %arg2: i32) -> (i32, i32) {
    %c0_i32 = arith.constant 0 : i32
    %c0_i32_0 = arith.constant 0 : i32
    return %c0_i32, %arg1 : i32, i32
  }
  func.func @transform_3(%arg0: i32, %arg1: i32, %arg2: i32) -> (i32, i32, i32) {
    %c0_i32 = arith.constant 0 : i32
    return %arg0, %arg1, %arg2 : i32, i32, i32
  }
}

module attributes {stable_mosaic.version = 11 : i64} {
  func.func @_conv1d_kernel(%arg0: i32, %arg1: i32, %arg2: i32, %arg3: memref<1x1x136x16xbf16, #tpu.memory_space<vmem>>, %arg4: memref<2x16x128xbf16, #tpu.memory_space<vmem>>, %arg5: memref<1x128xf32, #tpu.memory_space<vmem>>, %arg6: memref<1x128x128xf32, #tpu.memory_space<vmem>>) attributes {dimension_semantics = [#tpu.dimension_semantics<parallel>, #tpu.dimension_semantics<parallel>, #tpu.dimension_semantics<parallel>], iteration_bounds = array<i64: 2, 1, 1>, scalar_prefetch = 0 : i64, scratch_operands = 0 : i64, tpu.core_type = #tpu.core_type<tc>, window_params = [{transform_indices = @transform_0, window_bounds = array<i64: 1, 1, 136, 16>}, {transform_indices = @transform_1, window_bounds = array<i64: 2, 16, 128>}, {transform_indices = @transform_2, window_bounds = array<i64: 1, 128>}, {transform_indices = @transform_3, window_bounds = array<i64: 1, 128, 128>}]} {
    %cst = arith.constant 0.000000e+00 : f32
    %0 = vector.broadcast %cst : f32 to vector<128x128xf32>
    %c0 = arith.constant 0 : index
    %c0_0 = arith.constant 0 : index
    %c0_1 = arith.constant 0 : index
    %c0_2 = arith.constant 0 : index
    %1 = vector.load %arg3[%c0, %c0_0, %c0_1, %c0_2] : memref<1x1x136x16xbf16, #tpu.memory_space<vmem>>, vector<1x1x128x16xbf16>
    %2 = vector.shape_cast %1 : vector<1x1x128x16xbf16> to vector<128x16xbf16>
    %c0_3 = arith.constant 0 : index
    %c0_4 = arith.constant 0 : index
    %c0_5 = arith.constant 0 : index
    %3 = vector.load %arg4[%c0_3, %c0_4, %c0_5] : memref<2x16x128xbf16, #tpu.memory_space<vmem>>, vector<1x16x128xbf16>
    %4 = vector.shape_cast %3 : vector<1x16x128xbf16> to vector<16x128xbf16>
    %cst_6 = arith.constant dense<0.000000e+00> : vector<128x128xf32>
    %5 = tpu.matmul %2, %4, %cst_6 {dimension_numbers = #tpu.dot_dimension_numbers<[1], [0], [0], [1], [0, 0, 1, 1], [], []>} : vector<128x16xbf16>, vector<16x128xbf16>, vector<128x128xf32> -> vector<128x128xf32>
    %6 = arith.addf %0, %5 : vector<128x128xf32>
    %c0_7 = arith.constant 0 : index
    %c0_8 = arith.constant 0 : index
    %c1 = arith.constant 1 : index
    %c0_9 = arith.constant 0 : index
    %7 = vector.load %arg3[%c0_7, %c0_8, %c1, %c0_9] : memref<1x1x136x16xbf16, #tpu.memory_space<vmem>>, vector<1x1x128x16xbf16>
    %8 = vector.shape_cast %7 : vector<1x1x128x16xbf16> to vector<128x16xbf16>
    %c1_10 = arith.constant 1 : index
    %c0_11 = arith.constant 0 : index
    %c0_12 = arith.constant 0 : index
    %9 = vector.load %arg4[%c1_10, %c0_11, %c0_12] : memref<2x16x128xbf16, #tpu.memory_space<vmem>>, vector<1x16x128xbf16>
    %10 = vector.shape_cast %9 : vector<1x16x128xbf16> to vector<16x128xbf16>
    %cst_13 = arith.constant dense<0.000000e+00> : vector<128x128xf32>
    %11 = tpu.matmul %8, %10, %cst_13 {dimension_numbers = #tpu.dot_dimension_numbers<[1], [0], [0], [1], [0, 0, 1, 1], [], []>} : vector<128x16xbf16>, vector<16x128xbf16>, vector<128x128xf32> -> vector<128x128xf32>
    %12 = arith.addf %6, %11 : vector<128x128xf32>
    %c0_14 = arith.constant 0 : index
    %c0_15 = arith.constant 0 : index
    %13 = vector.load %arg5[%c0_14, %c0_15] : memref<1x128xf32, #tpu.memory_space<vmem>>, vector<1x128xf32>
    %14 = vector.broadcast %13 : vector<1x128xf32> to vector<128x128xf32>
    %15 = arith.addf %12, %14 : vector<128x128xf32>
    %16 = tpu.transpose %15, [1, 0] : vector<128x128xf32> -> vector<128x128xf32>
    %c0_16 = arith.constant 0 : index
    %c0_17 = arith.constant 0 : index
    %c0_18 = arith.constant 0 : index
    %17 = vector.load %arg6[%c0_16, %c0_17, %c0_18] : memref<1x128x128xf32, #tpu.memory_space<vmem>>, vector<1x128x128xf32>
    %18 = vector.shape_cast %17 : vector<1x128x128xf32> to vector<128x128xf32>
    %19 = vector.shape_cast %16 : vector<128x128xf32> to vector<1x128x128xf32>
    tpu.vector_store %arg6[%c0_16, %c0_17, %c0_18], %19 {strides = array<i32>} : memref<1x128x128xf32, #tpu.memory_space<vmem>>, vector<1x128x128xf32>,
    return
  }
  func.func @transform_0(%arg0: i32, %arg1: i32, %arg2: i32) -> (i32, i32, i32, i32) {
    %c0_i32 = arith.constant 0 : i32
    %c0_i32_0 = arith.constant 0 : i32
    %c0_i32_1 = arith.constant 0 : i32
    return %arg0, %arg2, %c0_i32, %c0_i32_0 : i32, i32, i32, i32
  }
  func.func @transform_1(%arg0: i32, %arg1: i32, %arg2: i32) -> (i32, i32, i32) {
    %c0_i32 = arith.constant 0 : i32
    %c0_i32_0 = arith.constant 0 : i32
    %c0_i32_1 = arith.constant 0 : i32
    return %c0_i32, %c0_i32_0, %arg1 : i32, i32, i32
  }
  func.func @transform_2(%arg0: i32, %arg1: i32, %arg2: i32) -> (i32, i32) {
    %c0_i32 = arith.constant 0 : i32
    %c0_i32_0 = arith.constant 0 : i32
    return %c0_i32, %arg1 : i32, i32
  }
  func.func @transform_3(%arg0: i32, %arg1: i32, %arg2: i32) -> (i32, i32, i32) {
    %c0_i32 = arith.constant 0 : i32
    return %arg0, %arg1, %arg2 : i32, i32, i32
  }
}

module attributes {stable_mosaic.version = 11 : i64} {
  func.func @_conv1d_kernel(%arg0: i32, %arg1: i32, %arg2: i32, %arg3: memref<1x1x136x16xbf16, #tpu.memory_space<vmem>>, %arg4: memref<2x16x128xbf16, #tpu.memory_space<vmem>>, %arg5: memref<1x128xf32, #tpu.memory_space<vmem>>, %arg6: memref<1x128x128xf32, #tpu.memory_space<vmem>>) attributes {dimension_semantics = [#tpu.dimension_semantics<parallel>, #tpu.dimension_semantics<parallel>, #tpu.dimension_semantics<parallel>], iteration_bounds = array<i64: 2, 1, 1>, scalar_prefetch = 0 : i64, scratch_operands = 0 : i64, tpu.core_type = #tpu.core_type<tc>, window_params = [{transform_indices = @transform_0, window_bounds = array<i64: 1, 1, 136, 16>}, {transform_indices = @transform_1, window_bounds = array<i64: 2, 16, 128>}, {transform_indices = @transform_2, window_bounds = array<i64: 1, 128>}, {transform_indices = @transform_3, window_bounds = array<i64: 1, 128, 128>}]} {
    %cst = arith.constant 0.000000e+00 : f32
    %0 = vector.broadcast %cst : f32 to vector<128x128xf32>
    %c0 = arith.constant 0 : index
    %c0_0 = arith.constant 0 : index
    %c0_1 = arith.constant 0 : index
    %c0_2 = arith.constant 0 : index
    %1 = vector.load %arg3[%c0, %c0_0, %c0_1, %c0_2] : memref<1x1x136x16xbf16, #tpu.memory_space<vmem>>, vector<1x1x128x16xbf16>
    %2 = vector.shape_cast %1 : vector<1x1x128x16xbf16> to vector<128x16xbf16>
    %c0_3 = arith.constant 0 : index
    %c0_4 = arith.constant 0 : index
    %c0_5 = arith.constant 0 : index
    %3 = vector.load %arg4[%c0_3, %c0_4, %c0_5] : memref<2x16x128xbf16, #tpu.memory_space<vmem>>, vector<1x16x128xbf16>
    %4 = vector.shape_cast %3 : vector<1x16x128xbf16> to vector<16x128xbf16>
    %cst_6 = arith.constant dense<0.000000e+00> : vector<128x128xf32>
    %5 = tpu.matmul %2, %4, %cst_6 {dimension_numbers = #tpu.dot_dimension_numbers<[1], [0], [0], [1], [0, 0, 1, 1], [], []>} : vector<128x16xbf16>, vector<16x128xbf16>, vector<128x128xf32> -> vector<128x128xf32>
    %6 = arith.addf %0, %5 : vector<128x128xf32>
    %c0_7 = arith.constant 0 : index
    %c0_8 = arith.constant 0 : index
    %c1 = arith.constant 1 : index
    %c0_9 = arith.constant 0 : index
    %7 = vector.load %arg3[%c0_7, %c0_8, %c1, %c0_9] : memref<1x1x136x16xbf16, #tpu.memory_space<vmem>>, vector<1x1x128x16xbf16>
    %8 = vector.shape_cast %7 : vector<1x1x128x16xbf16> to vector<128x16xbf16>
    %c1_10 = arith.constant 1 : index
    %c0_11 = arith.constant 0 : index
    %c0_12 = arith.constant 0 : index
    %9 = vector.load %arg4[%c1_10, %c0_11, %c0_12] : memref<2x16x128xbf16, #tpu.memory_space<vmem>>, vector<1x16x128xbf16>
    %10 = vector.shape_cast %9 : vector<1x16x128xbf16> to vector<16x128xbf16>
    %cst_13 = arith.constant dense<0.000000e+00> : vector<128x128xf32>
    %11 = tpu.matmul %8, %10, %cst_13 {dimension_numbers = #tpu.dot_dimension_numbers<[1], [0], [0], [1], [0, 0, 1, 1], [], []>} : vector<128x16xbf16>, vector<16x128xbf16>, vector<128x128xf32> -> vector<128x128xf32>
    %12 = arith.addf %6, %11 : vector<128x128xf32>
    %c0_14 = arith.constant 0 : index
    %c0_15 = arith.constant 0 : index
    %13 = vector.load %arg5[%c0_14, %c0_15] : memref<1x128xf32, #tpu.memory_space<vmem>>, vector<1x128xf32>
    %14 = vector.broadcast %13 : vector<1x128xf32> to vector<128x128xf32>
    %15 = arith.addf %12, %14 : vector<128x128xf32>
    %c0_16 = arith.constant 0 : index
    %c0_17 = arith.constant 0 : index
    %c0_18 = arith.constant 0 : index
    %16 = vector.load %arg6[%c0_16, %c0_17, %c0_18] : memref<1x128x128xf32, #tpu.memory_space<vmem>>, vector<1x128x128xf32>
    %17 = vector.shape_cast %16 : vector<1x128x128xf32> to vector<128x128xf32>
    %18 = vector.shape_cast %15 : vector<128x128xf32> to vector<1x128x128xf32>
    tpu.vector_store %arg6[%c0_16, %c0_17, %c0_18], %18 {strides = array<i32>} : memref<1x128x128xf32, #tpu.memory_space<vmem>>, vector<1x128x128xf32>,
    return
  }
  func.func @transform_0(%arg0: i32, %arg1: i32, %arg2: i32) -> (i32, i32, i32, i32) {
    %c0_i32 = arith.constant 0 : i32
    %c0_i32_0 = arith.constant 0 : i32
    %c0_i32_1 = arith.constant 0 : i32
    return %arg0, %arg2, %c0_i32, %c0_i32_0 : i32, i32, i32, i32
  }
  func.func @transform_1(%arg0: i32, %arg1: i32, %arg2: i32) -> (i32, i32, i32) {
    %c0_i32 = arith.constant 0 : i32
    %c0_i32_0 = arith.constant 0 : i32
    %c0_i32_1 = arith.constant 0 : i32
    return %c0_i32, %c0_i32_0, %arg1 : i32, i32, i32
  }
  func.func @transform_2(%arg0: i32, %arg1: i32, %arg2: i32) -> (i32, i32) {
    %c0_i32 = arith.constant 0 : i32
    %c0_i32_0 = arith.constant 0 : i32
    return %c0_i32, %arg1 : i32, i32
  }
  func.func @transform_3(%arg0: i32, %arg1: i32, %arg2: i32) -> (i32, i32, i32) {
    %c0_i32 = arith.constant 0 : i32
    return %arg0, %arg2, %arg1 : i32, i32, i32
  }
}

</mosaic_0001>

<llo_original>
// kernel: tpu_custom_call.1
$region0: #{tpu_custom_call.1}
  #allocation0 [shape = 'u32[]', space=smem, size = 0x4, offset = 0x4, fixed_abs, tag = 'smem constant byte address 0x4 - core index']
  #allocation1 [shape = 'u32[72,128]{1,0:T(1,128)}', space=vmem, size = 0x9000, scoped, tag = 'internal scratch']
  %s0 = inlined_call_operand.vmem [shape: bf16[2,1,136,16], index: 0, kind: input, shape index: {}]
  %s1 = inlined_call_operand.vmem [shape: bf16[2,16,128], index: 1, kind: input, shape index: {}]
  %s2 = inlined_call_operand.vmem [shape: f32[1,128], index: 2, kind: input, shape index: {}]
  %s3 = inlined_call_operand.hbm [shape: f32[2,128,128], index: 3, kind: output, shape index: {}]
  %s4 = sld [smem:[#allocation0]]
  $region45: #{tpu_custom_call.1} parent=0
    _
  %s6 = ssub.s32 1, %s4
  %s7 = scalar_select 0, %s6, %s4
  $region1: #{tpu_custom_call.1} parent=0
    #allocation2 [shape = 'u8[131072]{0}', space=vmem, size = 0x20000, scoped, tag = 'output window, operand 0']
    #allocation3 [shape = 's32[2]{0}', space=sflag, size = 0x8, scoped, tag = 'scoped memory for tpu_custom_call.1']
    %8 = vsyncpa [#allocation3], 0
    %s9 = scalar_lea.sflag [#allocation3], 1
    %10 = vsyncpa %s9, 0
    loop: start=0, step=1, limit=4
    $region2: #{tpu_custom_call.1} parent=1 // loop_pre_header
      _
    $region3: #{tpu_custom_call.1} parent=1 // loop_header
      %s12 = sphi 0, %s16
      %p13 = scmp.ge.s32.totalorder %s12, 4
      %s19 = sphi 0, %s38
      %s20 = sphi 0, %s34
      %s21 = sphi 0, %s30
      %s22 = sphi 0, %s19
      %s23 = sphi 0, %s20
      %s24 = sphi 0, %s21
      %s25 = sphi 0, %s22
      %s26 = sphi 0, %s23
      %s27 = sphi 0, %s24
      %s43 = sphi 0, %s45
      %s46 = sphi 0, %s43
      %s47 = sphi 0, %s46
      %s63 = sphi 0, %s47
      %s69 = sphi 0, %s71
      %s72 = sphi 0, %s69
      %s73 = sphi 0, %s72
      %s89 = sphi 0, %s73
      %s95 = sphi 0, %s97
      %s98 = sphi 0, %s95
      %s99 = sphi 0, %s98
      %s115 = sphi 0, %s99
      %s125 = sphi 0, %s127
      %s128 = sphi 0, %s125
      %s129 = sphi 0, %s128
      %s145 = sphi 0, %s129
    $region4: #{tpu_custom_call.1} parent=1 // loop_header_branch
      %15 = sbr.rel (%p13) target = $region8
    $region5: #{tpu_custom_call.1} parent=1 // loop_body
      %s17 = ssub.s32 %s12, 1
      %s18 = ssub.s32 %s12, 2
      %s28 = sadd.s32 1, %s21
      %p29 = scmp.ge.s32.totalorder %s28, 1
      %s30 = scalar_select %p29, 0, %s28
      %s31 = sadd.s32 1, %s20
      %s32 = scalar_select %p29, %s31, %s20
      %p33 = scmp.ge.s32.totalorder %s32, 1
      %s34 = scalar_select %p33, 0, %s32
      %s35 = sadd.s32 1, %s19
      %s36 = scalar_select %p33, %s35, %s19
      %p37 = scmp.ge.s32.totalorder %s36, 2
      %s38 = scalar_select %p37, 0, %s36
      %s39 = ssub.s32 %s19, %s38
      %s40 = ssub.s32 %s21, %s30
      %s41 = sor.u32 %s39, %s40
      %p42 = scmp.eq.s32.totalorder %s41, 0
      %s44 = sadd.s32 %s43, 1
      %s45 = scalar_select %p42, %s43, %s44
      %p48 = pneg %p42
      %p49 = scmp.eq.s32.totalorder %s12, 1
      %p50 = por %p48, %p49
      %p51 = scmp.ne.s32.totalorder %s43, %s46
      %p52 = scmp.eq.s32.totalorder %s12, 0
      %p53 = por %p51, %p52
      %p54 = scmp.ne.s32.totalorder %s43, %s46
      %p55 = scmp.eq.s32.totalorder %s17, 1
      %p56 = por %p54, %p55
      %p57 = scmp.ne.s32.totalorder %s46, %s47
      %p58 = scmp.eq.s32.totalorder %s17, 0
      %p59 = por %p57, %p58
      %p60 = scmp.ne.s32.totalorder %s46, %s47
      %p61 = scmp.eq.s32.totalorder %s18, 1
      %p62 = por %p60, %p61
      %p64 = scmp.ne.s32.totalorder %s47, %s63
      %p65 = scmp.eq.s32.totalorder %s18, 0
      %p66 = por %p64, %p65
      %s67 = ssub.s32 %s20, %s34
      %p68 = scmp.eq.s32.totalorder %s67, 0
      %s70 = sadd.s32 %s69, 1
      %s71 = scalar_select %p68, %s69, %s70
      %p74 = pneg %p68
      %p75 = scmp.eq.s32.totalorder %s12, 1
      %p76 = por %p74, %p75
      %p77 = scmp.ne.s32.totalorder %s69, %s72
      %p78 = scmp.eq.s32.totalorder %s12, 0
      %p79 = por %p77, %p78
      %p80 = scmp.ne.s32.totalorder %s69, %s72
      %p81 = scmp.eq.s32.totalorder %s17, 1
      %p82 = por %p80, %p81
      %p83 = scmp.ne.s32.totalorder %s72, %s73
      %p84 = scmp.eq.s32.totalorder %s17, 0
      %p85 = por %p83, %p84
      %p86 = scmp.ne.s32.totalorder %s72, %s73
      %p87 = scmp.eq.s32.totalorder %s18, 1
      %p88 = por %p86, %p87
      %p90 = scmp.ne.s32.totalorder %s73, %s89
      %p91 = scmp.eq.s32.totalorder %s18, 0
      %p92 = por %p90, %p91
      %s93 = ssub.s32 %s20, %s34
      %p94 = scmp.eq.s32.totalorder %s93, 0
      %s96 = sadd.s32 %s95, 1
      %s97 = scalar_select %p94, %s95, %s96
      %p100 = pneg %p94
      %p101 = scmp.eq.s32.totalorder %s12, 1
      %p102 = por %p100, %p101
      %p103 = scmp.ne.s32.totalorder %s95, %s98
      %p104 = scmp.eq.s32.totalorder %s12, 0
      %p105 = por %p103, %p104
      %p106 = scmp.ne.s32.totalorder %s95, %s98
      %p107 = scmp.eq.s32.totalorder %s17, 1
      %p108 = por %p106, %p107
      %p109 = scmp.ne.s32.totalorder %s98, %s99
      %p110 = scmp.eq.s32.totalorder %s17, 0
      %p111 = por %p109, %p110
      %p112 = scmp.ne.s32.totalorder %s98, %s99
      %p113 = scmp.eq.s32.totalorder %s18, 1
      %p114 = por %p112, %p113
      %p116 = scmp.ne.s32.totalorder %s99, %s115
      %p117 = scmp.eq.s32.totalorder %s18, 0
      %p118 = por %p116, %p117
      %s119 = ssub.s32 %s19, %s38
      %s120 = ssub.s32 %s20, %s34
      %s121 = sor.u32 %s119, %s120
      %s122 = ssub.s32 %s21, %s30
      %s123 = sor.u32 %s121, %s122
      %p124 = scmp.eq.s32.totalorder %s123, 0
      %s126 = sadd.s32 %s125, 1
      %s127 = scalar_select %p124, %s125, %s126
      %p130 = pneg %p124
      %p131 = scmp.eq.s32.totalorder %s12, 1
      %p132 = por %p130, %p131
      %p133 = scmp.ne.s32.totalorder %s125, %s128
      %p134 = scmp.eq.s32.totalorder %s12, 0
      %p135 = por %p133, %p134
      %p136 = scmp.ne.s32.totalorder %s125, %s128
      %p137 = scmp.eq.s32.totalorder %s17, 1
      %p138 = por %p136, %p137
      %p139 = scmp.ne.s32.totalorder %s128, %s129
      %p140 = scmp.eq.s32.totalorder %s17, 0
      %p141 = por %p139, %p140
      %p142 = scmp.ne.s32.totalorder %s128, %s129
      %p143 = scmp.eq.s32.totalorder %s18, 1
      %p144 = por %p142, %p143
      %p146 = scmp.ne.s32.totalorder %s129, %s145
      %p147 = scmp.eq.s32.totalorder %s18, 0
      %p148 = por %p146, %p147
      %p149 = scmp.le.s32.totalorder 1, %s12
      %p150 = scmp.lt.s32.totalorder %s12, 3
      %p151 = pnand %p149, %p150
      %p152 = pneg %p151
      // Predicated region
      $region9: #{tpu_custom_call.1} parent=5 // pred_check
        _
      $region10: #{tpu_custom_call.1} parent=5 // pred_check_branch
        %154 = sbr.rel (%p151) target = $region12
      $region11: #{tpu_custom_call.1} parent=5 // pred_region
        %s155 = ssub.s32 %s12, 1
        // Predicated region
        $region13: #{tpu_custom_call.1} parent=11 // pred_check
          %p156 = pneg %p85
        $region14: #{tpu_custom_call.1} parent=11 // pred_check_branch
          %158 = sbr.rel (%p156) target = $region16
        $region15: #{tpu_custom_call.1} parent=11 // pred_region
          %p159 = scmp.lt.s32.totalorder %s23, 0
          %s160 = scalar_select %p159, %s23, 0
          %s161 = smul.addr %s160, 4
          %s162 = scalar_lea.vmem %s1, %s161
        $region16: #{tpu_custom_call.1} parent=11 // pred_fallthru
          _
        // Predicated region
        $region17: #{tpu_custom_call.1} parent=11 // pred_check
          %p163 = pneg %p111
        $region18: #{tpu_custom_call.1} parent=11 // pred_check_branch
          %165 = sbr.rel (%p163) target = $region20
        $region19: #{tpu_custom_call.1} parent=11 // pred_region
          %p166 = scmp.lt.s32.totalorder %s23, 0
          %s167 = scalar_select %p166, %s23, 0
          %s168 = scalar_lea.vmem %s2, %s167
        $region20: #{tpu_custom_call.1} parent=11 // pred_fallthru
          _
      $region12: #{tpu_custom_call.1} parent=5 // pred_fallthru
        _
      %p169 = scmp.lt.s32.totalorder %s12, 2
      // Predicated region
      $region21: #{tpu_custom_call.1} parent=5 // pred_check
        %p170 = pneg %p169
      $region22: #{tpu_custom_call.1} parent=5 // pred_check_branch
        %172 = sbr.rel (%p170) target = $region24
      $region23: #{tpu_custom_call.1} parent=5 // pred_region
        // Predicated region
        $region25: #{tpu_custom_call.1} parent=23 // pred_check
          %p173 = pneg %p53
        $region26: #{tpu_custom_call.1} parent=23 // pred_check_branch
          %175 = sbr.rel (%p173) target = $region28
        $region27: #{tpu_custom_call.1} parent=23 // pred_region
          %p176 = scmp.lt.s32.totalorder %s19, 1
          %s177 = scalar_select %p176, %s19, 1
          %p178 = scmp.lt.s32.totalorder %s21, 0
          %s179 = scalar_select %p178, %s21, 0
          %s180 = smul.addr %s179, 17
          %s181 = smul.addr %s177, 17
          %s182 = sadd.s32 %s180, %s181
          %s183 = smul.addr %s182, 4
          %s184 = scalar_lea.vmem %s0, %s183
        $region28: #{tpu_custom_call.1} parent=23 // pred_fallthru
          _
      $region24: #{tpu_custom_call.1} parent=5 // pred_fallthru
        _
      %p185 = scmp.le.s32.totalorder 1, %s12
      %p186 = scmp.lt.s32.totalorder %s12, 3
      %p187 = pnand %p185, %p186
      %p188 = pneg %p187
      // Predicated region
      $region29: #{tpu_custom_call.1} parent=5 // pred_check
        _
      $region30: #{tpu_custom_call.1} parent=5 // pred_check_branch
        %190 = sbr.rel (%p187) target = $region32
      $region31: #{tpu_custom_call.1} parent=5 // pred_region
        %s191 = ssub.s32 %s12, 1
        %p192 = scmp.lt.s32.totalorder %s22, 1
        %s193 = scalar_select %p192, %s22, 1
        %p194 = scmp.lt.s32.totalorder %s24, 0
        %s195 = scalar_select %p194, %s24, 0
        %s196 = smul.addr %s195, 17
        %s197 = smul.addr %s193, 17
        %s198 = sadd.s32 %s196, %s197
        %s199 = smul.addr %s198, 4
        %s200 = scalar_lea.vmem %s0, %s199
        %p201 = pneg %p59
        %p202 = pneg %p56
        %p203 = scmp.lt.s32.totalorder %s23, 0
        %s204 = scalar_select %p203, %s23, 0
        %s205 = smul.addr %s204, 4
        %s206 = scalar_lea.vmem %s1, %s205
        %p207 = pneg %p85
        %p208 = pneg %p82
        %p209 = scmp.lt.s32.totalorder %s23, 0
        %s210 = scalar_select %p209, %s23, 0
        %s211 = scalar_lea.vmem %s2, %s210
        %p212 = pneg %p111
        %p213 = pneg %p108
        %p214 = pneg %p141
        %p215 = pneg %p138
        %s216 = sand.u32 %s128, 1
        %s217 = scalar_lea.sflag [#allocation3], %s216
        %s218 = sand.u32 %s128, 1
        %s219 = smul.addr %s218, 128
        %s220 = scalar_lea.vmem [#allocation2], %s219
        %p221 = scmp.lt.s32.totalorder %s22, 1
        %s222 = scalar_select %p221, %s22, 1
        %p223 = scmp.lt.s32.totalorder %s24, 0
        %s224 = scalar_select %p223, %s24, 0
        %s225 = smul.addr %s224, 17
        %s226 = smul.addr %s222, 17
        %s227 = sadd.s32 %s225, %s226
        %s228 = smul.addr %s227, 4
        %s229 = scalar_lea.vmem %s0, %s228
        %p230 = scmp.lt.s32.totalorder %s23, 0
        %s231 = scalar_select %p230, %s23, 0
        %s232 = smul.addr %s231, 4
        %s233 = scalar_lea.vmem %s1, %s232
        %p234 = scmp.lt.s32.totalorder %s23, 0
        %s235 = scalar_select %p234, %s23, 0
        %s236 = scalar_lea.vmem %s2, %s235
        %s237 = smul.u32 16, %s23
        %v239 = vld [vmem:[%s229] sm:$0xf]
        %v240 = vld [vmem:[%s229 + $0x4] sm:$0xf]
        %v241 = vld [vmem:[%s229 + $0x8] sm:$0xf]
        %v242 = vld [vmem:[%s229 + $0xc] sm:$0xf]
        %v243 = vld [vmem:[%s229 + $0x10] sm:$0xf]
        %v244 = vld [vmem:[%s229 + $0x14] sm:$0xf]
        %v245 = vld [vmem:[%s229 + $0x18] sm:$0xf]
        %v246 = vld [vmem:[%s229 + $0x1c] sm:$0xf]
        %v247 = vld [vmem:[%s229 + $0x20] sm:$0xf]
        %v248 = vld [vmem:[%s229 + $0x24] sm:$0xf]
        %v249 = vld [vmem:[%s229 + $0x28] sm:$0xf]
        %v250 = vld [vmem:[%s229 + $0x2c] sm:$0xf]
        %v251 = vld [vmem:[%s229 + $0x30] sm:$0xf]
        %v252 = vld [vmem:[%s229 + $0x34] sm:$0xf]
        %v253 = vld [vmem:[%s229 + $0x38] sm:$0xf]
        %v254 = vld [vmem:[%s229 + $0x3c] sm:$0xf]
        %v255 = vld [vmem:[%s233] sm:$0xf]
        %v256 = vld [vmem:[%s233 + $0x4] sm:$0xf]
        %v257 = vld [vmem:[%s229 + $0x40] sm:$0x1]
        %s258 = scalar_lea.vmem %s233, 8
        %v259 = vld [vmem:[%s258] sm:$0xf]
        %v260 = vld [vmem:[%s258 + $0x4] sm:$0xf]
        %v278 = vunpack.c.l.b16 %v239
        %v279 = vunpack.c.l.b16 %v240
        %v280 = vunpack.c.l.b16 %v241
        %v281 = vunpack.c.l.b16 %v242
        %v282 = vunpack.c.l.b16 %v243
        %v283 = vunpack.c.l.b16 %v244
        %v284 = vunpack.c.l.b16 %v245
        %v285 = vunpack.c.l.b16 %v246
        %v286 = vunpack.c.l.b16 %v247
        %v287 = vunpack.c.l.b16 %v248
        %v288 = vunpack.c.l.b16 %v249
        %v289 = vunpack.c.l.b16 %v250
        %v290 = vunpack.c.l.b16 %v251
        %v291 = vunpack.c.l.b16 %v252
        %v292 = vunpack.c.l.b16 %v253
        %v293 = vunpack.c.l.b16 %v254
        %v294 = vunpack.c.l.b16 %v257
        %v295 = vpack.c.b16 %v279, %v278
        %v296 = vpack.c.b16 %v281, %v280
        %v297 = vpack.c.b16 %v283, %v282
        %v298 = vpack.c.b16 %v285, %v284
        %v299 = vpack.c.b16 %v287, %v286
        %v300 = vpack.c.b16 %v289, %v288
        %v301 = vpack.c.b16 %v291, %v290
        %v302 = vpack.c.b16 %v293, %v292
        %v303 = vpack.c.b16 %v294, %v294
        %vm304 = vsmask.f32 7424
        %v306 = vshrl.u32 %v295, 16
        %v308 = vshll.u32 %v295, 16
        %v310 = vrot.slane %v308, 1
        %v311 = vor.u32 %v306, %v310
        %v313 = vshll.u32 %v296, 16
        %v315 = vrot.slane %v313, 1
        %v316 = vsel %vm304, %v311, %v315
        %v317 = vshrl.u32 %v296, 16
        %v319 = vor.u32 %v317, %v315
        %v321 = vshll.u32 %v297, 16
        %v323 = vrot.slane %v321, 1
        %v324 = vsel %vm304, %v319, %v323
        %v325 = vshrl.u32 %v297, 16
        %v327 = vor.u32 %v325, %v323
        %v329 = vshll.u32 %v298, 16
        %v331 = vrot.slane %v329, 1
        %v332 = vsel %vm304, %v327, %v331
        %v333 = vshrl.u32 %v298, 16
        %v335 = vor.u32 %v333, %v331
        %v337 = vshll.u32 %v299, 16
        %v339 = vrot.slane %v337, 1
        %v340 = vsel %vm304, %v335, %v339
        %v341 = vshrl.u32 %v299, 16
        %v343 = vor.u32 %v341, %v339
        %v345 = vshll.u32 %v300, 16
        %v347 = vrot.slane %v345, 1
        %v348 = vsel %vm304, %v343, %v347
        %v349 = vshrl.u32 %v300, 16
        %v351 = vor.u32 %v349, %v347
        %v353 = vshll.u32 %v301, 16
        %v355 = vrot.slane %v353, 1
        %v356 = vsel %vm304, %v351, %v355
        %v357 = vshrl.u32 %v301, 16
        %v359 = vor.u32 %v357, %v355
        %v361 = vshll.u32 %v302, 16
        %v363 = vrot.slane %v361, 1
        %v364 = vsel %vm304, %v359, %v363
        %v365 = vshrl.u32 %v302, 16
        %v367 = vor.u32 %v365, %v363
        %v369 = vshll.u32 %v303, 16
        %v371 = vrot.slane %v369, 1
        %v372 = vsel %vm304, %v367, %v371
        %v375 = vunpack.c.l.b16 %v259
        %v376 = vunpack.c.l.b16 %v260
        %v377 = vpack.c.b16 %v376, %v375
        %vm379 = vcmask 130048
        %v381 = vsel %vm379, %v316, 0
        %v384 = vsel %vm379, %v324, 0
        %v387 = vsel %vm379, %v332, 0
        %v390 = vsel %vm379, %v340, 0
        %v393 = vsel %vm379, %v348, 0
        %v396 = vsel %vm379, %v356, 0
        %v399 = vsel %vm379, %v364, 0
        %v402 = vsel %vm379, %v372, 0
        %404 = vmatpush.bf16.msra.mxu0 0
        %405 = vmatpush.bf16.msra.mxu0 0
        %406 = vmatpush.bf16.msra.mxu0 0
        %407 = vmatpush.bf16.msra.mxu0 0
        %408 = vmatpush.bf16.msra.mxu0 0
        %409 = vmatpush.bf16.msra.mxu0 0
        %410 = vmatpush.bf16.msra.mxu0 0
        %411 = vmatpush.bf16.msra.mxu0 %v377
        %412 = vmatmul.bf16.gmra.mxu0 %v381
        %v413 = vpop.f32.mrf.mxu0
        %v414 = vadd.f32 0.0, %v413
        %v415 = vpop.f32.mrf.mxu0
        %v416 = vadd.f32 0.0, %v415
        %417 = vmatmul.bf16.gmra.mxu0 %v384
        %v418 = vpop.f32.mrf.mxu0
        %v419 = vadd.f32 0.0, %v418
        %v420 = vpop.f32.mrf.mxu0
        %v421 = vadd.f32 0.0, %v420
        %422 = vmatmul.bf16.gmra.mxu0 %v387
        %v423 = vpop.f32.mrf.mxu0
        %v424 = vadd.f32 0.0, %v423
        %v425 = vpop.f32.mrf.mxu0
        %v426 = vadd.f32 0.0, %v425
        %427 = vmatmul.bf16.gmra.mxu0 %v390
        %v428 = vpop.f32.mrf.mxu0
        %v429 = vadd.f32 0.0, %v428
        %v430 = vpop.f32.mrf.mxu0
        %v431 = vadd.f32 0.0, %v430
        %432 = vmatmul.bf16.gmra.mxu0 %v393
        %v433 = vpop.f32.mrf.mxu0
        %v434 = vadd.f32 0.0, %v433
        %v435 = vpop.f32.mrf.mxu0
        %v436 = vadd.f32 0.0, %v435
        %437 = vmatmul.bf16.gmra.mxu0 %v396
        %v438 = vpop.f32.mrf.mxu0
        %v439 = vadd.f32 0.0, %v438
        %v440 = vpop.f32.mrf.mxu0
        %v441 = vadd.f32 0.0, %v440
        %442 = vmatmul.bf16.gmra.mxu0 %v399
        %v443 = vpop.f32.mrf.mxu0
        %v444 = vadd.f32 0.0, %v443
        %v445 = vpop.f32.mrf.mxu0
        %v446 = vadd.f32 0.0, %v445
        %447 = vmatmul.bf16.gmra.mxu0 %v402
        %v448 = vpop.f32.mrf.mxu0
        %v449 = vadd.f32 0.0, %v448
        %v450 = vpop.f32.mrf.mxu0
        %v451 = vadd.f32 0.0, %v450
        %452 = vdwg.mxu0
        %v455 = vunpack.c.l.b16 %v255
        %v456 = vunpack.c.l.b16 %v256
        %v457 = vpack.c.b16 %v456, %v455
        %v459 = vsel %vm379, %v295, 0
        %v461 = vsel %vm379, %v296, 0
        %v463 = vsel %vm379, %v297, 0
        %v465 = vsel %vm379, %v298, 0
        %v467 = vsel %vm379, %v299, 0
        %v469 = vsel %vm379, %v300, 0
        %v471 = vsel %vm379, %v301, 0
        %v473 = vsel %vm379, %v302, 0
        %475 = vmatpush.bf16.msra.mxu0 0
        %476 = vmatpush.bf16.msra.mxu0 0
        %477 = vmatpush.bf16.msra.mxu0 0
        %478 = vmatpush.bf16.msra.mxu0 0
        %479 = vmatpush.bf16.msra.mxu0 0
        %480 = vmatpush.bf16.msra.mxu0 0
        %481 = vmatpush.bf16.msra.mxu0 0
        %482 = vmatpush.bf16.msra.mxu0 %v457
        %483 = vmatmul.bf16.gmra.mxu0 %v459
        %v484 = vpop.f32.mrf.mxu0
        %v485 = vadd.f32 %v414, %v484
        %v486 = vpop.f32.mrf.mxu0
        %v487 = vadd.f32 %v416, %v486
        %488 = vmatmul.bf16.gmra.mxu0 %v461
        %v489 = vpop.f32.mrf.mxu0
        %v490 = vadd.f32 %v419, %v489
        %v491 = vpop.f32.mrf.mxu0
        %v492 = vadd.f32 %v421, %v491
        %493 = vmatmul.bf16.gmra.mxu0 %v463
        %v494 = vpop.f32.mrf.mxu0
        %v495 = vadd.f32 %v424, %v494
        %v496 = vpop.f32.mrf.mxu0
        %v497 = vadd.f32 %v426, %v496
        %498 = vmatmul.bf16.gmra.mxu0 %v465
        %v499 = vpop.f32.mrf.mxu0
        %v500 = vadd.f32 %v429, %v499
        %v501 = vpop.f32.mrf.mxu0
        %v502 = vadd.f32 %v431, %v501
        %503 = vmatmul.bf16.gmra.mxu0 %v467
        %v504 = vpop.f32.mrf.mxu0
        %v505 = vadd.f32 %v434, %v504
        %v506 = vpop.f32.mrf.mxu0
        %v507 = vadd.f32 %v436, %v506
        %508 = vmatmul.bf16.gmra.mxu0 %v469
        %v509 = vpop.f32.mrf.mxu0
        %v510 = vadd.f32 %v439, %v509
        %v511 = vpop.f32.mrf.mxu0
        %v512 = vadd.f32 %v441, %v511
        %513 = vmatmul.bf16.gmra.mxu0 %v471
        %v514 = vpop.f32.mrf.mxu0
        %v515 = vadd.f32 %v444, %v514
        %v516 = vpop.f32.mrf.mxu0
        %v517 = vadd.f32 %v446, %v516
        %518 = vmatmul.bf16.gmra.mxu0 %v473
        %v519 = vpop.f32.mrf.mxu0
        %v520 = vadd.f32 %v449, %v519
        %v521 = vpop.f32.mrf.mxu0
        %v522 = vadd.f32 %v451, %v521
        %523 = vdwg.mxu0
        %v524 = vld [vmem:[%s236] sm:$0x1]
        %v526 = vperm.slane %v524, 0
        %v528 = vadd.f32 %v485, %v526
        %v529 = vadd.f32 %v487, %v526
        %v530 = vadd.f32 %v490, %v526
        %v531 = vadd.f32 %v492, %v526
        %v532 = vadd.f32 %v495, %v526
        %v533 = vadd.f32 %v497, %v526
        %v534 = vadd.f32 %v500, %v526
        %v535 = vadd.f32 %v502, %v526
        %v536 = vadd.f32 %v505, %v526
        %v537 = vadd.f32 %v507, %v526
        %v538 = vadd.f32 %v510, %v526
        %v539 = vadd.f32 %v512, %v526
        %v540 = vadd.f32 %v515, %v526
        %v541 = vadd.f32 %v517, %v526
        %v542 = vadd.f32 %v520, %v526
        %v543 = vadd.f32 %v522, %v526
        %544 = vxpose.xlu0.b32.start [1/16] %v528, 128
        %545 = vxpose.xlu0.b32.cont [2/16] %v529, 128
        %546 = vxpose.xlu0.b32.cont [3/16] %v530, 128
        %547 = vxpose.xlu0.b32.cont [4/16] %v531, 128
        %548 = vxpose.xlu0.b32.cont [5/16] %v532, 128
        %549 = vxpose.xlu0.b32.cont [6/16] %v533, 128
        %550 = vxpose.xlu0.b32.cont [7/16] %v534, 128
        %551 = vxpose.xlu0.b32.cont [8/16] %v535, 128
        %552 = vxpose.xlu0.b32.cont [9/16] %v536, 128
        %553 = vxpose.xlu0.b32.cont [10/16] %v537, 128
        %554 = vxpose.xlu0.b32.cont [11/16] %v538, 128
        %555 = vxpose.xlu0.b32.cont [12/16] %v539, 128
        %556 = vxpose.xlu0.b32.cont [13/16] %v540, 128
        %557 = vxpose.xlu0.b32.cont [14/16] %v541, 128
        %558 = vxpose.xlu0.b32.cont [15/16] %v542, 128
        %559 = vxpose.xlu0.b32.end [16/16] %v543, 128
        %v560 = vpop.trf.xlu0
        %v561 = vpop.trf.xlu0
        %v562 = vpop.trf.xlu0
        %v563 = vpop.trf.xlu0
        %v564 = vpop.trf.xlu0
        %v565 = vpop.trf.xlu0
        %v566 = vpop.trf.xlu0
        %v567 = vpop.trf.xlu0
        %v568 = vpop.trf.xlu0
        %v569 = vpop.trf.xlu0
        %v570 = vpop.trf.xlu0
        %v571 = vpop.trf.xlu0
        %v572 = vpop.trf.xlu0
        %v573 = vpop.trf.xlu0
        %v574 = vpop.trf.xlu0
        %v575 = vpop.trf.xlu0
        %576 = vst [vmem:[%s220] sm:$0xff] %v560
        %577 = vst [vmem:[%s220 + $0x8] sm:$0xff] %v561
        %578 = vst [vmem:[%s220 + $0x10] sm:$0xff] %v562
        %579 = vst [vmem:[%s220 + $0x18] sm:$0xff] %v563
        %580 = vst [vmem:[%s220 + $0x20] sm:$0xff] %v564
        %581 = vst [vmem:[%s220 + $0x28] sm:$0xff] %v565
        %582 = vst [vmem:[%s220 + $0x30] sm:$0xff] %v566
        %583 = vst [vmem:[%s220 + $0x38] sm:$0xff] %v567
        %584 = vst [vmem:[%s220 + $0x40] sm:$0xff] %v568
        %585 = vst [vmem:[%s220 + $0x48] sm:$0xff] %v569
        %586 = vst [vmem:[%s220 + $0x50] sm:$0xff] %v570
        %587 = vst [vmem:[%s220 + $0x58] sm:$0xff] %v571
        %588 = vst [vmem:[%s220 + $0x60] sm:$0xff] %v572
        %589 = vst [vmem:[%s220 + $0x68] sm:$0xff] %v573
        %590 = vst [vmem:[%s220 + $0x70] sm:$0xff] %v574
        %591 = vst [vmem:[%s220 + $0x78] sm:$0xff] %v575
        %s592 = sand.u32 %s128, 1
        %s593 = scalar_lea.sflag [#allocation3], %s592
        %s594 = sand.u32 %s128, 1
        %s595 = smul.addr %s594, 128
        %s596 = scalar_lea.vmem [#allocation2], %s595
        // Predicated region
        $region33: #{tpu_custom_call.1} parent=31 // pred_check
          %p597 = pneg %p138
        $region34: #{tpu_custom_call.1} parent=31 // pred_check_branch
          %599 = sbr.rel (%p597) target = $region36
        $region35: #{tpu_custom_call.1} parent=31 // pred_region
          %s600 = smul.u32 16, %s23
          %602 = vsyncadd %s593, 0
          %s603 = sadd.s32 %s24, %s600
          %s604 = smul.addr %s22, 16
          %s605 = sadd.s32 %s603, %s604
          %s606 = smul.addr %s605, 8
          %s607 = scalar_lea.hbm %s3, %s606
          %s608 = sshll.u32 %s596, 4
          %s609 = int_to_ptr.vmem [resolvable:$true] %s608
          %s610 = sshll.u32 %s607, 4
          %s611 = int_to_ptr.hbm [resolvable:$true] %s610
          %616 = dma.vmem_to_hbm [thread:$0]  %s609, 2048, %s611, %s593, 128, 128, 8
        $region36: #{tpu_custom_call.1} parent=31 // pred_fallthru
          _
      $region32: #{tpu_custom_call.1} parent=5 // pred_fallthru
        _
      %p617 = scmp.le.s32.totalorder 2, %s12
      // Predicated region
      $region37: #{tpu_custom_call.1} parent=5 // pred_check
        %p618 = pneg %p617
      $region38: #{tpu_custom_call.1} parent=5 // pred_check_branch
        %620 = sbr.rel (%p618) target = $region40
      $region39: #{tpu_custom_call.1} parent=5 // pred_region
        %s621 = ssub.s32 %s12, 2
        // Predicated region
        $region41: #{tpu_custom_call.1} parent=39 // pred_check
          %p622 = pneg %p144
        $region42: #{tpu_custom_call.1} parent=39 // pred_check_branch
          %624 = sbr.rel (%p622) target = $region44
        $region43: #{tpu_custom_call.1} parent=39 // pred_region
          %s625 = sand.u32 %s129, 1
          %s626 = scalar_lea.sflag [#allocation3], %s625
          %s627 = sand.u32 %s129, 1
          %s628 = smul.addr %s627, 128
          %s629 = scalar_lea.vmem [#allocation2], %s628
          %631 = dma.done %s626, 2048
        $region44: #{tpu_custom_call.1} parent=39 // pred_fallthru
          _
      $region40: #{tpu_custom_call.1} parent=5 // pred_fallthru
        _
    $region6: #{tpu_custom_call.1} parent=1 // loop_footer
      %s16 = sadd.s32 1, %s12
    $region7: #{tpu_custom_call.1} parent=1 // loop_footer_branch
      %11 = sbr.rel target = $region3
    $region8: #{tpu_custom_call.1} parent=1 // loop_exit
      _
    %632 = vsyncpa [#allocation3], 1
    %s633 = scalar_lea.sflag [#allocation3], 1
    %634 = vsyncpa %s633, 1

// kernel: tpu_custom_call.1
$region0: #{tpu_custom_call.1}
  #allocation0 [shape = 'u32[]', space=smem, size = 0x4, offset = 0x4, fixed_abs, tag = 'smem constant byte address 0x4 - core index']
  #allocation1 [shape = 'u32[72,128]{1,0:T(1,128)}', space=vmem, size = 0x9000, scoped, tag = 'internal scratch']
  %s0 = inlined_call_operand.vmem [shape: bf16[2,1,136,16], index: 0, kind: input, shape index: {}]
  %s1 = inlined_call_operand.vmem [shape: bf16[2,16,128], index: 1, kind: input, shape index: {}]
  %s2 = inlined_call_operand.vmem [shape: f32[1,128], index: 2, kind: input, shape index: {}]
  %s3 = inlined_call_operand.hbm [shape: f32[2,128,128], index: 3, kind: output, shape index: {}]
  %s4 = sld [smem:[#allocation0]]
  $region45: #{tpu_custom_call.1} parent=0
    _
  %s6 = ssub.s32 1, %s4
  %s7 = scalar_select 0, %s6, %s4
  $region1: #{tpu_custom_call.1} parent=0
    #allocation2 [shape = 'u8[131072]{0}', space=vmem, size = 0x20000, scoped, tag = 'output window, operand 0']
    #allocation3 [shape = 's32[2]{0}', space=sflag, size = 0x8, scoped, tag = 'scoped memory for tpu_custom_call.1']
    %8 = vsyncpa [#allocation3], 0
    %s9 = scalar_lea.sflag [#allocation3], 1
    %10 = vsyncpa %s9, 0
    loop: start=0, step=1, limit=4
    $region2: #{tpu_custom_call.1} parent=1 // loop_pre_header
      _
    $region3: #{tpu_custom_call.1} parent=1 // loop_header
      %s12 = sphi 0, %s16
      %p13 = scmp.ge.s32.totalorder %s12, 4
      %s19 = sphi 0, %s38
      %s20 = sphi 0, %s34
      %s21 = sphi 0, %s30
      %s22 = sphi 0, %s19
      %s23 = sphi 0, %s20
      %s24 = sphi 0, %s21
      %s25 = sphi 0, %s22
      %s26 = sphi 0, %s23
      %s27 = sphi 0, %s24
      %s43 = sphi 0, %s45
      %s46 = sphi 0, %s43
      %s47 = sphi 0, %s46
      %s63 = sphi 0, %s47
      %s69 = sphi 0, %s71
      %s72 = sphi 0, %s69
      %s73 = sphi 0, %s72
      %s89 = sphi 0, %s73
      %s95 = sphi 0, %s97
      %s98 = sphi 0, %s95
      %s99 = sphi 0, %s98
      %s115 = sphi 0, %s99
      %s125 = sphi 0, %s127
      %s128 = sphi 0, %s125
      %s129 = sphi 0, %s128
      %s145 = sphi 0, %s129
    $region4: #{tpu_custom_call.1} parent=1 // loop_header_branch
      %15 = sbr.rel (%p13) target = $region8
    $region5: #{tpu_custom_call.1} parent=1 // loop_body
      %s17 = ssub.s32 %s12, 1
      %s18 = ssub.s32 %s12, 2
      %s28 = sadd.s32 1, %s21
      %p29 = scmp.ge.s32.totalorder %s28, 1
      %s30 = scalar_select %p29, 0, %s28
      %s31 = sadd.s32 1, %s20
      %s32 = scalar_select %p29, %s31, %s20
      %p33 = scmp.ge.s32.totalorder %s32, 1
      %s34 = scalar_select %p33, 0, %s32
      %s35 = sadd.s32 1, %s19
      %s36 = scalar_select %p33, %s35, %s19
      %p37 = scmp.ge.s32.totalorder %s36, 2
      %s38 = scalar_select %p37, 0, %s36
      %s39 = ssub.s32 %s19, %s38
      %s40 = ssub.s32 %s21, %s30
      %s41 = sor.u32 %s39, %s40
      %p42 = scmp.eq.s32.totalorder %s41, 0
      %s44 = sadd.s32 %s43, 1
      %s45 = scalar_select %p42, %s43, %s44
      %p48 = pneg %p42
      %p49 = scmp.eq.s32.totalorder %s12, 1
      %p50 = por %p48, %p49
      %p51 = scmp.ne.s32.totalorder %s43, %s46
      %p52 = scmp.eq.s32.totalorder %s12, 0
      %p53 = por %p51, %p52
      %p54 = scmp.ne.s32.totalorder %s43, %s46
      %p55 = scmp.eq.s32.totalorder %s17, 1
      %p56 = por %p54, %p55
      %p57 = scmp.ne.s32.totalorder %s46, %s47
      %p58 = scmp.eq.s32.totalorder %s17, 0
      %p59 = por %p57, %p58
      %p60 = scmp.ne.s32.totalorder %s46, %s47
      %p61 = scmp.eq.s32.totalorder %s18, 1
      %p62 = por %p60, %p61
      %p64 = scmp.ne.s32.totalorder %s47, %s63
      %p65 = scmp.eq.s32.totalorder %s18, 0
      %p66 = por %p64, %p65
      %s67 = ssub.s32 %s20, %s34
      %p68 = scmp.eq.s32.totalorder %s67, 0
      %s70 = sadd.s32 %s69, 1
      %s71 = scalar_select %p68, %s69, %s70
      %p74 = pneg %p68
      %p75 = scmp.eq.s32.totalorder %s12, 1
      %p76 = por %p74, %p75
      %p77 = scmp.ne.s32.totalorder %s69, %s72
      %p78 = scmp.eq.s32.totalorder %s12, 0
      %p79 = por %p77, %p78
      %p80 = scmp.ne.s32.totalorder %s69, %s72
      %p81 = scmp.eq.s32.totalorder %s17, 1
      %p82 = por %p80, %p81
      %p83 = scmp.ne.s32.totalorder %s72, %s73
      %p84 = scmp.eq.s32.totalorder %s17, 0
      %p85 = por %p83, %p84
      %p86 = scmp.ne.s32.totalorder %s72, %s73
      %p87 = scmp.eq.s32.totalorder %s18, 1
      %p88 = por %p86, %p87
      %p90 = scmp.ne.s32.totalorder %s73, %s89
      %p91 = scmp.eq.s32.totalorder %s18, 0
      %p92 = por %p90, %p91
      %s93 = ssub.s32 %s20, %s34
      %p94 = scmp.eq.s32.totalorder %s93, 0
      %s96 = sadd.s32 %s95, 1
      %s97 = scalar_select %p94, %s95, %s96
      %p100 = pneg %p94
      %p101 = scmp.eq.s32.totalorder %s12, 1
      %p102 = por %p100, %p101
      %p103 = scmp.ne.s32.totalorder %s95, %s98
      %p104 = scmp.eq.s32.totalorder %s12, 0
      %p105 = por %p103, %p104
      %p106 = scmp.ne.s32.totalorder %s95, %s98
      %p107 = scmp.eq.s32.totalorder %s17, 1
      %p108 = por %p106, %p107
      %p109 = scmp.ne.s32.totalorder %s98, %s99
      %p110 = scmp.eq.s32.totalorder %s17, 0
      %p111 = por %p109, %p110
      %p112 = scmp.ne.s32.totalorder %s98, %s99
      %p113 = scmp.eq.s32.totalorder %s18, 1
      %p114 = por %p112, %p113
      %p116 = scmp.ne.s32.totalorder %s99, %s115
      %p117 = scmp.eq.s32.totalorder %s18, 0
      %p118 = por %p116, %p117
      %s119 = ssub.s32 %s19, %s38
      %s120 = ssub.s32 %s20, %s34
      %s121 = sor.u32 %s119, %s120
      %s122 = ssub.s32 %s21, %s30
      %s123 = sor.u32 %s121, %s122
      %p124 = scmp.eq.s32.totalorder %s123, 0
      %s126 = sadd.s32 %s125, 1
      %s127 = scalar_select %p124, %s125, %s126
      %p130 = pneg %p124
      %p131 = scmp.eq.s32.totalorder %s12, 1
      %p132 = por %p130, %p131
      %p133 = scmp.ne.s32.totalorder %s125, %s128
      %p134 = scmp.eq.s32.totalorder %s12, 0
      %p135 = por %p133, %p134
      %p136 = scmp.ne.s32.totalorder %s125, %s128
      %p137 = scmp.eq.s32.totalorder %s17, 1
      %p138 = por %p136, %p137
      %p139 = scmp.ne.s32.totalorder %s128, %s129
      %p140 = scmp.eq.s32.totalorder %s17, 0
      %p141 = por %p139, %p140
      %p142 = scmp.ne.s32.totalorder %s128, %s129
      %p143 = scmp.eq.s32.totalorder %s18, 1
      %p144 = por %p142, %p143
      %p146 = scmp.ne.s32.totalorder %s129, %s145
      %p147 = scmp.eq.s32.totalorder %s18, 0
      %p148 = por %p146, %p147
      %p149 = scmp.le.s32.totalorder 1, %s12
      %p150 = scmp.lt.s32.totalorder %s12, 3
      %p151 = pnand %p149, %p150
      %p152 = pneg %p151
      // Predicated region
      $region9: #{tpu_custom_call.1} parent=5 // pred_check
        _
      $region10: #{tpu_custom_call.1} parent=5 // pred_check_branch
        %154 = sbr.rel (%p151) target = $region12
      $region11: #{tpu_custom_call.1} parent=5 // pred_region
        %s155 = ssub.s32 %s12, 1
        // Predicated region
        $region13: #{tpu_custom_call.1} parent=11 // pred_check
          %p156 = pneg %p85
        $region14: #{tpu_custom_call.1} parent=11 // pred_check_branch
          %158 = sbr.rel (%p156) target = $region16
        $region15: #{tpu_custom_call.1} parent=11 // pred_region
          %p159 = scmp.lt.s32.totalorder %s23, 0
          %s160 = scalar_select %p159, %s23, 0
          %s161 = smul.addr %s160, 4
          %s162 = scalar_lea.vmem %s1, %s161
        $region16: #{tpu_custom_call.1} parent=11 // pred_fallthru
          _
        // Predicated region
        $region17: #{tpu_custom_call.1} parent=11 // pred_check
          %p163 = pneg %p111
        $region18: #{tpu_custom_call.1} parent=11 // pred_check_branch
          %165 = sbr.rel (%p163) target = $region20
        $region19: #{tpu_custom_call.1} parent=11 // pred_region
          %p166 = scmp.lt.s32.totalorder %s23, 0
          %s167 = scalar_select %p166, %s23, 0
          %s168 = scalar_lea.vmem %s2, %s167
        $region20: #{tpu_custom_call.1} parent=11 // pred_fallthru
          _
      $region12: #{tpu_custom_call.1} parent=5 // pred_fallthru
        _
      %p169 = scmp.lt.s32.totalorder %s12, 2
      // Predicated region
      $region21: #{tpu_custom_call.1} parent=5 // pred_check
        %p170 = pneg %p169
      $region22: #{tpu_custom_call.1} parent=5 // pred_check_branch
        %172 = sbr.rel (%p170) target = $region24
      $region23: #{tpu_custom_call.1} parent=5 // pred_region
        // Predicated region
        $region25: #{tpu_custom_call.1} parent=23 // pred_check
          %p173 = pneg %p53
        $region26: #{tpu_custom_call.1} parent=23 // pred_check_branch
          %175 = sbr.rel (%p173) target = $region28
        $region27: #{tpu_custom_call.1} parent=23 // pred_region
          %p176 = scmp.lt.s32.totalorder %s19, 1
          %s177 = scalar_select %p176, %s19, 1
          %p178 = scmp.lt.s32.totalorder %s21, 0
          %s179 = scalar_select %p178, %s21, 0
          %s180 = smul.addr %s179, 17
          %s181 = smul.addr %s177, 17
          %s182 = sadd.s32 %s180, %s181
          %s183 = smul.addr %s182, 4
          %s184 = scalar_lea.vmem %s0, %s183
        $region28: #{tpu_custom_call.1} parent=23 // pred_fallthru
          _
      $region24: #{tpu_custom_call.1} parent=5 // pred_fallthru
        _
      %p185 = scmp.le.s32.totalorder 1, %s12
      %p186 = scmp.lt.s32.totalorder %s12, 3
      %p187 = pnand %p185, %p186
      %p188 = pneg %p187
      // Predicated region
      $region29: #{tpu_custom_call.1} parent=5 // pred_check
        _
      $region30: #{tpu_custom_call.1} parent=5 // pred_check_branch
        %190 = sbr.rel (%p187) target = $region32
      $region31: #{tpu_custom_call.1} parent=5 // pred_region
        %s191 = ssub.s32 %s12, 1
        %p192 = scmp.lt.s32.totalorder %s22, 1
        %s193 = scalar_select %p192, %s22, 1
        %p194 = scmp.lt.s32.totalorder %s24, 0
        %s195 = scalar_select %p194, %s24, 0
        %s196 = smul.addr %s195, 17
        %s197 = smul.addr %s193, 17
        %s198 = sadd.s32 %s196, %s197
        %s199 = smul.addr %s198, 4
        %s200 = scalar_lea.vmem %s0, %s199
        %p201 = pneg %p59
        %p202 = pneg %p56
        %p203 = scmp.lt.s32.totalorder %s23, 0
        %s204 = scalar_select %p203, %s23, 0
        %s205 = smul.addr %s204, 4
        %s206 = scalar_lea.vmem %s1, %s205
        %p207 = pneg %p85
        %p208 = pneg %p82
        %p209 = scmp.lt.s32.totalorder %s23, 0
        %s210 = scalar_select %p209, %s23, 0
        %s211 = scalar_lea.vmem %s2, %s210
        %p212 = pneg %p111
        %p213 = pneg %p108
        %p214 = pneg %p141
        %p215 = pneg %p138
        %s216 = sand.u32 %s128, 1
        %s217 = scalar_lea.sflag [#allocation3], %s216
        %s218 = sand.u32 %s128, 1
        %s219 = smul.addr %s218, 128
        %s220 = scalar_lea.vmem [#allocation2], %s219
        %p221 = scmp.lt.s32.totalorder %s22, 1
        %s222 = scalar_select %p221, %s22, 1
        %p223 = scmp.lt.s32.totalorder %s24, 0
        %s224 = scalar_select %p223, %s24, 0
        %s225 = smul.addr %s224, 17
        %s226 = smul.addr %s222, 17
        %s227 = sadd.s32 %s225, %s226
        %s228 = smul.addr %s227, 4
        %s229 = scalar_lea.vmem %s0, %s228
        %p230 = scmp.lt.s32.totalorder %s23, 0
        %s231 = scalar_select %p230, %s23, 0
        %s232 = smul.addr %s231, 4
        %s233 = scalar_lea.vmem %s1, %s232
        %p234 = scmp.lt.s32.totalorder %s23, 0
        %s235 = scalar_select %p234, %s23, 0
        %s236 = scalar_lea.vmem %s2, %s235
        %s237 = smul.u32 16, %s23
        %v239 = vld [vmem:[%s229] sm:$0xf]
        %v240 = vld [vmem:[%s229 + $0x4] sm:$0xf]
        %v241 = vld [vmem:[%s229 + $0x8] sm:$0xf]
        %v242 = vld [vmem:[%s229 + $0xc] sm:$0xf]
        %v243 = vld [vmem:[%s229 + $0x10] sm:$0xf]
        %v244 = vld [vmem:[%s229 + $0x14] sm:$0xf]
        %v245 = vld [vmem:[%s229 + $0x18] sm:$0xf]
        %v246 = vld [vmem:[%s229 + $0x1c] sm:$0xf]
        %v247 = vld [vmem:[%s229 + $0x20] sm:$0xf]
        %v248 = vld [vmem:[%s229 + $0x24] sm:$0xf]
        %v249 = vld [vmem:[%s229 + $0x28] sm:$0xf]
        %v250 = vld [vmem:[%s229 + $0x2c] sm:$0xf]
        %v251 = vld [vmem:[%s229 + $0x30] sm:$0xf]
        %v252 = vld [vmem:[%s229 + $0x34] sm:$0xf]
        %v253 = vld [vmem:[%s229 + $0x38] sm:$0xf]
        %v254 = vld [vmem:[%s229 + $0x3c] sm:$0xf]
        %v255 = vld [vmem:[%s233] sm:$0xf]
        %v256 = vld [vmem:[%s233 + $0x4] sm:$0xf]
        %v257 = vld [vmem:[%s229 + $0x40] sm:$0x1]
        %s258 = scalar_lea.vmem %s233, 8
        %v259 = vld [vmem:[%s258] sm:$0xf]
        %v260 = vld [vmem:[%s258 + $0x4] sm:$0xf]
        %v278 = vunpack.c.l.b16 %v239
        %v279 = vunpack.c.l.b16 %v240
        %v280 = vunpack.c.l.b16 %v241
        %v281 = vunpack.c.l.b16 %v242
        %v282 = vunpack.c.l.b16 %v243
        %v283 = vunpack.c.l.b16 %v244
        %v284 = vunpack.c.l.b16 %v245
        %v285 = vunpack.c.l.b16 %v246
        %v286 = vunpack.c.l.b16 %v247
        %v287 = vunpack.c.l.b16 %v248
        %v288 = vunpack.c.l.b16 %v249
        %v289 = vunpack.c.l.b16 %v250
        %v290 = vunpack.c.l.b16 %v251
        %v291 = vunpack.c.l.b16 %v252
        %v292 = vunpack.c.l.b16 %v253
        %v293 = vunpack.c.l.b16 %v254
        %v294 = vunpack.c.l.b16 %v257
        %v295 = vpack.c.b16 %v279, %v278
        %v296 = vpack.c.b16 %v281, %v280
        %v297 = vpack.c.b16 %v283, %v282
        %v298 = vpack.c.b16 %v285, %v284
        %v299 = vpack.c.b16 %v287, %v286
        %v300 = vpack.c.b16 %v289, %v288
        %v301 = vpack.c.b16 %v291, %v290
        %v302 = vpack.c.b16 %v293, %v292
        %v303 = vpack.c.b16 %v294, %v294
        %vm304 = vsmask.f32 7424
        %v306 = vshrl.u32 %v295, 16
        %v308 = vshll.u32 %v295, 16
        %v310 = vrot.slane %v308, 1
        %v311 = vor.u32 %v306, %v310
        %v313 = vshll.u32 %v296, 16
        %v315 = vrot.slane %v313, 1
        %v316 = vsel %vm304, %v311, %v315
        %v317 = vshrl.u32 %v296, 16
        %v319 = vor.u32 %v317, %v315
        %v321 = vshll.u32 %v297, 16
        %v323 = vrot.slane %v321, 1
        %v324 = vsel %vm304, %v319, %v323
        %v325 = vshrl.u32 %v297, 16
        %v327 = vor.u32 %v325, %v323
        %v329 = vshll.u32 %v298, 16
        %v331 = vrot.slane %v329, 1
        %v332 = vsel %vm304, %v327, %v331
        %v333 = vshrl.u32 %v298, 16
        %v335 = vor.u32 %v333, %v331
        %v337 = vshll.u32 %v299, 16
        %v339 = vrot.slane %v337, 1
        %v340 = vsel %vm304, %v335, %v339
        %v341 = vshrl.u32 %v299, 16
        %v343 = vor.u32 %v341, %v339
        %v345 = vshll.u32 %v300, 16
        %v347 = vrot.slane %v345, 1
        %v348 = vsel %vm304, %v343, %v347
        %v349 = vshrl.u32 %v300, 16
        %v351 = vor.u32 %v349, %v347
        %v353 = vshll.u32 %v301, 16
        %v355 = vrot.slane %v353, 1
        %v356 = vsel %vm304, %v351, %v355
        %v357 = vshrl.u32 %v301, 16
        %v359 = vor.u32 %v357, %v355
        %v361 = vshll.u32 %v302, 16
        %v363 = vrot.slane %v361, 1
        %v364 = vsel %vm304, %v359, %v363
        %v365 = vshrl.u32 %v302, 16
        %v367 = vor.u32 %v365, %v363
        %v369 = vshll.u32 %v303, 16
        %v371 = vrot.slane %v369, 1
        %v372 = vsel %vm304, %v367, %v371
        %v375 = vunpack.c.l.b16 %v259
        %v376 = vunpack.c.l.b16 %v260
        %v377 = vpack.c.b16 %v376, %v375
        %vm379 = vcmask 130048
        %v381 = vsel %vm379, %v316, 0
        %v384 = vsel %vm379, %v324, 0
        %v387 = vsel %vm379, %v332, 0
        %v390 = vsel %vm379, %v340, 0
        %v393 = vsel %vm379, %v348, 0
        %v396 = vsel %vm379, %v356, 0
        %v399 = vsel %vm379, %v364, 0
        %v402 = vsel %vm379, %v372, 0
        %404 = vmatpush.bf16.msra.mxu0 0
        %405 = vmatpush.bf16.msra.mxu0 0
        %406 = vmatpush.bf16.msra.mxu0 0
        %407 = vmatpush.bf16.msra.mxu0 0
        %408 = vmatpush.bf16.msra.mxu0 0
        %409 = vmatpush.bf16.msra.mxu0 0
        %410 = vmatpush.bf16.msra.mxu0 0
        %411 = vmatpush.bf16.msra.mxu0 %v377
        %412 = vmatmul.bf16.gmra.mxu0 %v381
        %v413 = vpop.f32.mrf.mxu0
        %v414 = vadd.f32 0.0, %v413
        %v415 = vpop.f32.mrf.mxu0
        %v416 = vadd.f32 0.0, %v415
        %417 = vmatmul.bf16.gmra.mxu0 %v384
        %v418 = vpop.f32.mrf.mxu0
        %v419 = vadd.f32 0.0, %v418
        %v420 = vpop.f32.mrf.mxu0
        %v421 = vadd.f32 0.0, %v420
        %422 = vmatmul.bf16.gmra.mxu0 %v387
        %v423 = vpop.f32.mrf.mxu0
        %v424 = vadd.f32 0.0, %v423
        %v425 = vpop.f32.mrf.mxu0
        %v426 = vadd.f32 0.0, %v425
        %427 = vmatmul.bf16.gmra.mxu0 %v390
        %v428 = vpop.f32.mrf.mxu0
        %v429 = vadd.f32 0.0, %v428
        %v430 = vpop.f32.mrf.mxu0
        %v431 = vadd.f32 0.0, %v430
        %432 = vmatmul.bf16.gmra.mxu0 %v393
        %v433 = vpop.f32.mrf.mxu0
        %v434 = vadd.f32 0.0, %v433
        %v435 = vpop.f32.mrf.mxu0
        %v436 = vadd.f32 0.0, %v435
        %437 = vmatmul.bf16.gmra.mxu0 %v396
        %v438 = vpop.f32.mrf.mxu0
        %v439 = vadd.f32 0.0, %v438
        %v440 = vpop.f32.mrf.mxu0
        %v441 = vadd.f32 0.0, %v440
        %442 = vmatmul.bf16.gmra.mxu0 %v399
        %v443 = vpop.f32.mrf.mxu0
        %v444 = vadd.f32 0.0, %v443
        %v445 = vpop.f32.mrf.mxu0
        %v446 = vadd.f32 0.0, %v445
        %447 = vmatmul.bf16.gmra.mxu0 %v402
        %v448 = vpop.f32.mrf.mxu0
        %v449 = vadd.f32 0.0, %v448
        %v450 = vpop.f32.mrf.mxu0
        %v451 = vadd.f32 0.0, %v450
        %452 = vdwg.mxu0
        %v455 = vunpack.c.l.b16 %v255
        %v456 = vunpack.c.l.b16 %v256
        %v457 = vpack.c.b16 %v456, %v455
        %v459 = vsel %vm379, %v295, 0
        %v461 = vsel %vm379, %v296, 0
        %v463 = vsel %vm379, %v297, 0
        %v465 = vsel %vm379, %v298, 0
        %v467 = vsel %vm379, %v299, 0
        %v469 = vsel %vm379, %v300, 0
        %v471 = vsel %vm379, %v301, 0
        %v473 = vsel %vm379, %v302, 0
        %475 = vmatpush.bf16.msra.mxu0 0
        %476 = vmatpush.bf16.msra.mxu0 0
        %477 = vmatpush.bf16.msra.mxu0 0
        %478 = vmatpush.bf16.msra.mxu0 0
        %479 = vmatpush.bf16.msra.mxu0 0
        %480 = vmatpush.bf16.msra.mxu0 0
        %481 = vmatpush.bf16.msra.mxu0 0
        %482 = vmatpush.bf16.msra.mxu0 %v457
        %483 = vmatmul.bf16.gmra.mxu0 %v459
        %v484 = vpop.f32.mrf.mxu0
        %v485 = vadd.f32 %v414, %v484
        %v486 = vpop.f32.mrf.mxu0
        %v487 = vadd.f32 %v416, %v486
        %488 = vmatmul.bf16.gmra.mxu0 %v461
        %v489 = vpop.f32.mrf.mxu0
        %v490 = vadd.f32 %v419, %v489
        %v491 = vpop.f32.mrf.mxu0
        %v492 = vadd.f32 %v421, %v491
        %493 = vmatmul.bf16.gmra.mxu0 %v463
        %v494 = vpop.f32.mrf.mxu0
        %v495 = vadd.f32 %v424, %v494
        %v496 = vpop.f32.mrf.mxu0
        %v497 = vadd.f32 %v426, %v496
        %498 = vmatmul.bf16.gmra.mxu0 %v465
        %v499 = vpop.f32.mrf.mxu0
        %v500 = vadd.f32 %v429, %v499
        %v501 = vpop.f32.mrf.mxu0
        %v502 = vadd.f32 %v431, %v501
        %503 = vmatmul.bf16.gmra.mxu0 %v467
        %v504 = vpop.f32.mrf.mxu0
        %v505 = vadd.f32 %v434, %v504
        %v506 = vpop.f32.mrf.mxu0
        %v507 = vadd.f32 %v436, %v506
        %508 = vmatmul.bf16.gmra.mxu0 %v469
        %v509 = vpop.f32.mrf.mxu0
        %v510 = vadd.f32 %v439, %v509
        %v511 = vpop.f32.mrf.mxu0
        %v512 = vadd.f32 %v441, %v511
        %513 = vmatmul.bf16.gmra.mxu0 %v471
        %v514 = vpop.f32.mrf.mxu0
        %v515 = vadd.f32 %v444, %v514
        %v516 = vpop.f32.mrf.mxu0
        %v517 = vadd.f32 %v446, %v516
        %518 = vmatmul.bf16.gmra.mxu0 %v473
        %v519 = vpop.f32.mrf.mxu0
        %v520 = vadd.f32 %v449, %v519
        %v521 = vpop.f32.mrf.mxu0
        %v522 = vadd.f32 %v451, %v521
        %523 = vdwg.mxu0
        %v524 = vld [vmem:[%s236] sm:$0x1]
        %v526 = vperm.slane %v524, 0
        %v528 = vadd.f32 %v485, %v526
        %v529 = vadd.f32 %v487, %v526
        %v530 = vadd.f32 %v490, %v526
        %v531 = vadd.f32 %v492, %v526
        %v532 = vadd.f32 %v495, %v526
        %v533 = vadd.f32 %v497, %v526
        %v534 = vadd.f32 %v500, %v526
        %v535 = vadd.f32 %v502, %v526
        %v536 = vadd.f32 %v505, %v526
        %v537 = vadd.f32 %v507, %v526
        %v538 = vadd.f32 %v510, %v526
        %v539 = vadd.f32 %v512, %v526
        %v540 = vadd.f32 %v515, %v526
        %v541 = vadd.f32 %v517, %v526
        %v542 = vadd.f32 %v520, %v526
        %v543 = vadd.f32 %v522, %v526
        %544 = vxpose.xlu0.b32.start [1/16] %v528, 128
        %545 = vxpose.xlu0.b32.cont [2/16] %v529, 128
        %546 = vxpose.xlu0.b32.cont [3/16] %v530, 128
        %547 = vxpose.xlu0.b32.cont [4/16] %v531, 128
        %548 = vxpose.xlu0.b32.cont [5/16] %v532, 128
        %549 = vxpose.xlu0.b32.cont [6/16] %v533, 128
        %550 = vxpose.xlu0.b32.cont [7/16] %v534, 128
        %551 = vxpose.xlu0.b32.cont [8/16] %v535, 128
        %552 = vxpose.xlu0.b32.cont [9/16] %v536, 128
        %553 = vxpose.xlu0.b32.cont [10/16] %v537, 128
        %554 = vxpose.xlu0.b32.cont [11/16] %v538, 128
        %555 = vxpose.xlu0.b32.cont [12/16] %v539, 128
        %556 = vxpose.xlu0.b32.cont [13/16] %v540, 128
        %557 = vxpose.xlu0.b32.cont [14/16] %v541, 128
        %558 = vxpose.xlu0.b32.cont [15/16] %v542, 128
        %559 = vxpose.xlu0.b32.end [16/16] %v543, 128
        %v560 = vpop.trf.xlu0
        %v561 = vpop.trf.xlu0
        %v562 = vpop.trf.xlu0
        %v563 = vpop.trf.xlu0
        %v564 = vpop.trf.xlu0
        %v565 = vpop.trf.xlu0
        %v566 = vpop.trf.xlu0
        %v567 = vpop.trf.xlu0
        %v568 = vpop.trf.xlu0
        %v569 = vpop.trf.xlu0
        %v570 = vpop.trf.xlu0
        %v571 = vpop.trf.xlu0
        %v572 = vpop.trf.xlu0
        %v573 = vpop.trf.xlu0
        %v574 = vpop.trf.xlu0
        %v575 = vpop.trf.xlu0
        %576 = vst [vmem:[%s220] sm:$0xff] %v560
        %577 = vst [vmem:[%s220 + $0x8] sm:$0xff] %v561
        %578 = vst [vmem:[%s220 + $0x10] sm:$0xff] %v562
        %579 = vst [vmem:[%s220 + $0x18] sm:$0xff] %v563
        %580 = vst [vmem:[%s220 + $0x20] sm:$0xff] %v564
        %581 = vst [vmem:[%s220 + $0x28] sm:$0xff] %v565
        %582 = vst [vmem:[%s220 + $0x30] sm:$0xff] %v566
        %583 = vst [vmem:[%s220 + $0x38] sm:$0xff] %v567
        %584 = vst [vmem:[%s220 + $0x40] sm:$0xff] %v568
        %585 = vst [vmem:[%s220 + $0x48] sm:$0xff] %v569
        %586 = vst [vmem:[%s220 + $0x50] sm:$0xff] %v570
        %587 = vst [vmem:[%s220 + $0x58] sm:$0xff] %v571
        %588 = vst [vmem:[%s220 + $0x60] sm:$0xff] %v572
        %589 = vst [vmem:[%s220 + $0x68] sm:$0xff] %v573
        %590 = vst [vmem:[%s220 + $0x70] sm:$0xff] %v574
        %591 = vst [vmem:[%s220 + $0x78] sm:$0xff] %v575
        %s592 = sand.u32 %s128, 1
        %s593 = scalar_lea.sflag [#allocation3], %s592
        %s594 = sand.u32 %s128, 1
        %s595 = smul.addr %s594, 128
        %s596 = scalar_lea.vmem [#allocation2], %s595
        // Predicated region
        $region33: #{tpu_custom_call.1} parent=31 // pred_check
          %p597 = pneg %p138
        $region34: #{tpu_custom_call.1} parent=31 // pred_check_branch
          %599 = sbr.rel (%p597) target = $region36
        $region35: #{tpu_custom_call.1} parent=31 // pred_region
          %s600 = smul.u32 16, %s23
          %602 = vsyncadd %s593, 0
          %s603 = sadd.s32 %s24, %s600
          %s604 = smul.addr %s22, 16
          %s605 = sadd.s32 %s603, %s604
          %s606 = smul.addr %s605, 8
          %s607 = scalar_lea.hbm %s3, %s606
          %s608 = sshll.u32 %s596, 4
          %s609 = int_to_ptr.vmem [resolvable:$true] %s608
          %s610 = sshll.u32 %s607, 4
          %s611 = int_to_ptr.hbm [resolvable:$true] %s610
          %616 = dma.vmem_to_hbm [thread:$0]  %s609, 2048, %s611, %s593, 128, 128, 8
        $region36: #{tpu_custom_call.1} parent=31 // pred_fallthru
          _
      $region32: #{tpu_custom_call.1} parent=5 // pred_fallthru
        _
      %p617 = scmp.le.s32.totalorder 2, %s12
      // Predicated region
      $region37: #{tpu_custom_call.1} parent=5 // pred_check
        %p618 = pneg %p617
      $region38: #{tpu_custom_call.1} parent=5 // pred_check_branch
        %620 = sbr.rel (%p618) target = $region40
      $region39: #{tpu_custom_call.1} parent=5 // pred_region
        %s621 = ssub.s32 %s12, 2
        // Predicated region
        $region41: #{tpu_custom_call.1} parent=39 // pred_check
          %p622 = pneg %p144
        $region42: #{tpu_custom_call.1} parent=39 // pred_check_branch
          %624 = sbr.rel (%p622) target = $region44
        $region43: #{tpu_custom_call.1} parent=39 // pred_region
          %s625 = sand.u32 %s129, 1
          %s626 = scalar_lea.sflag [#allocation3], %s625
          %s627 = sand.u32 %s129, 1
          %s628 = smul.addr %s627, 128
          %s629 = scalar_lea.vmem [#allocation2], %s628
          %631 = dma.done %s626, 2048
        $region44: #{tpu_custom_call.1} parent=39 // pred_fallthru
          _
      $region40: #{tpu_custom_call.1} parent=5 // pred_fallthru
        _
    $region6: #{tpu_custom_call.1} parent=1 // loop_footer
      %s16 = sadd.s32 1, %s12
    $region7: #{tpu_custom_call.1} parent=1 // loop_footer_branch
      %11 = sbr.rel target = $region3
    $region8: #{tpu_custom_call.1} parent=1 // loop_exit
      _
    %632 = vsyncpa [#allocation3], 1
    %s633 = scalar_lea.sflag [#allocation3], 1
    %634 = vsyncpa %s633, 1

// kernel: tpu_custom_call.1
$region0: #{tpu_custom_call.1}
  #allocation0 [shape = 'u32[]', space=smem, size = 0x4, offset = 0x4, fixed_abs, tag = 'smem constant byte address 0x4 - core index']
  #allocation1 [shape = 'u32[72,128]{1,0:T(1,128)}', space=vmem, size = 0x9000, scoped, tag = 'internal scratch']
  %s0 = inlined_call_operand.vmem [shape: bf16[2,1,136,16], index: 0, kind: input, shape index: {}]
  %s1 = inlined_call_operand.vmem [shape: bf16[2,16,128], index: 1, kind: input, shape index: {}]
  %s2 = inlined_call_operand.vmem [shape: f32[1,128], index: 2, kind: input, shape index: {}]
  %s3 = inlined_call_operand.hbm [shape: f32[2,128,128], index: 3, kind: output, shape index: {}]
  %s4 = sld [smem:[#allocation0]]
  $region45: #{tpu_custom_call.1} parent=0
    _
  %s6 = ssub.s32 1, %s4
  %s7 = scalar_select 0, %s6, %s4
  $region1: #{tpu_custom_call.1} parent=0
    #allocation2 [shape = 'u8[131072]{0}', space=vmem, size = 0x20000, scoped, tag = 'output window, operand 0']
    #allocation3 [shape = 's32[2]{0}', space=sflag, size = 0x8, scoped, tag = 'scoped memory for tpu_custom_call.1']
    %8 = vsyncpa [#allocation3], 0
    %s9 = scalar_lea.sflag [#allocation3], 1
    %10 = vsyncpa %s9, 0
    loop: start=0, step=1, limit=4
    $region2: #{tpu_custom_call.1} parent=1 // loop_pre_header
      _
    $region3: #{tpu_custom_call.1} parent=1 // loop_header
      %s12 = sphi 0, %s16
      %p13 = scmp.ge.s32.totalorder %s12, 4
      %s19 = sphi 0, %s38
      %s20 = sphi 0, %s34
      %s21 = sphi 0, %s30
      %s22 = sphi 0, %s19
      %s23 = sphi 0, %s20
      %s24 = sphi 0, %s21
      %s25 = sphi 0, %s22
      %s26 = sphi 0, %s23
      %s27 = sphi 0, %s24
      %s43 = sphi 0, %s45
      %s46 = sphi 0, %s43
      %s47 = sphi 0, %s46
      %s63 = sphi 0, %s47
      %s69 = sphi 0, %s71
      %s72 = sphi 0, %s69
      %s73 = sphi 0, %s72
      %s89 = sphi 0, %s73
      %s95 = sphi 0, %s97
      %s98 = sphi 0, %s95
      %s99 = sphi 0, %s98
      %s115 = sphi 0, %s99
      %s125 = sphi 0, %s127
      %s128 = sphi 0, %s125
      %s129 = sphi 0, %s128
      %s145 = sphi 0, %s129
    $region4: #{tpu_custom_call.1} parent=1 // loop_header_branch
      %15 = sbr.rel (%p13) target = $region8
    $region5: #{tpu_custom_call.1} parent=1 // loop_body
      %s17 = ssub.s32 %s12, 1
      %s18 = ssub.s32 %s12, 2
      %s28 = sadd.s32 1, %s21
      %p29 = scmp.ge.s32.totalorder %s28, 1
      %s30 = scalar_select %p29, 0, %s28
      %s31 = sadd.s32 1, %s20
      %s32 = scalar_select %p29, %s31, %s20
      %p33 = scmp.ge.s32.totalorder %s32, 1
      %s34 = scalar_select %p33, 0, %s32
      %s35 = sadd.s32 1, %s19
      %s36 = scalar_select %p33, %s35, %s19
      %p37 = scmp.ge.s32.totalorder %s36, 2
      %s38 = scalar_select %p37, 0, %s36
      %s39 = ssub.s32 %s19, %s38
      %s40 = ssub.s32 %s21, %s30
      %s41 = sor.u32 %s39, %s40
      %p42 = scmp.eq.s32.totalorder %s41, 0
      %s44 = sadd.s32 %s43, 1
      %s45 = scalar_select %p42, %s43, %s44
      %p48 = pneg %p42
      %p49 = scmp.eq.s32.totalorder %s12, 1
      %p50 = por %p48, %p49
      %p51 = scmp.ne.s32.totalorder %s43, %s46
      %p52 = scmp.eq.s32.totalorder %s12, 0
      %p53 = por %p51, %p52
      %p54 = scmp.ne.s32.totalorder %s43, %s46
      %p55 = scmp.eq.s32.totalorder %s17, 1
      %p56 = por %p54, %p55
      %p57 = scmp.ne.s32.totalorder %s46, %s47
      %p58 = scmp.eq.s32.totalorder %s17, 0
      %p59 = por %p57, %p58
      %p60 = scmp.ne.s32.totalorder %s46, %s47
      %p61 = scmp.eq.s32.totalorder %s18, 1
      %p62 = por %p60, %p61
      %p64 = scmp.ne.s32.totalorder %s47, %s63
      %p65 = scmp.eq.s32.totalorder %s18, 0
      %p66 = por %p64, %p65
      %s67 = ssub.s32 %s20, %s34
      %p68 = scmp.eq.s32.totalorder %s67, 0
      %s70 = sadd.s32 %s69, 1
      %s71 = scalar_select %p68, %s69, %s70
      %p74 = pneg %p68
      %p75 = scmp.eq.s32.totalorder %s12, 1
      %p76 = por %p74, %p75
      %p77 = scmp.ne.s32.totalorder %s69, %s72
      %p78 = scmp.eq.s32.totalorder %s12, 0
      %p79 = por %p77, %p78
      %p80 = scmp.ne.s32.totalorder %s69, %s72
      %p81 = scmp.eq.s32.totalorder %s17, 1
      %p82 = por %p80, %p81
      %p83 = scmp.ne.s32.totalorder %s72, %s73
      %p84 = scmp.eq.s32.totalorder %s17, 0
      %p85 = por %p83, %p84
      %p86 = scmp.ne.s32.totalorder %s72, %s73
      %p87 = scmp.eq.s32.totalorder %s18, 1
      %p88 = por %p86, %p87
      %p90 = scmp.ne.s32.totalorder %s73, %s89
      %p91 = scmp.eq.s32.totalorder %s18, 0
      %p92 = por %p90, %p91
      %s93 = ssub.s32 %s20, %s34
      %p94 = scmp.eq.s32.totalorder %s93, 0
      %s96 = sadd.s32 %s95, 1
      %s97 = scalar_select %p94, %s95, %s96
      %p100 = pneg %p94
      %p101 = scmp.eq.s32.totalorder %s12, 1
      %p102 = por %p100, %p101
      %p103 = scmp.ne.s32.totalorder %s95, %s98
      %p104 = scmp.eq.s32.totalorder %s12, 0
      %p105 = por %p103, %p104
      %p106 = scmp.ne.s32.totalorder %s95, %s98
      %p107 = scmp.eq.s32.totalorder %s17, 1
      %p108 = por %p106, %p107
      %p109 = scmp.ne.s32.totalorder %s98, %s99
      %p110 = scmp.eq.s32.totalorder %s17, 0
      %p111 = por %p109, %p110
      %p112 = scmp.ne.s32.totalorder %s98, %s99
      %p113 = scmp.eq.s32.totalorder %s18, 1
      %p114 = por %p112, %p113
      %p116 = scmp.ne.s32.totalorder %s99, %s115
      %p117 = scmp.eq.s32.totalorder %s18, 0
      %p118 = por %p116, %p117
      %s119 = ssub.s32 %s19, %s38
      %s120 = ssub.s32 %s21, %s30
      %s121 = sor.u32 %s119, %s120
      %s122 = ssub.s32 %s20, %s34
      %s123 = sor.u32 %s121, %s122
      %p124 = scmp.eq.s32.totalorder %s123, 0
      %s126 = sadd.s32 %s125, 1
      %s127 = scalar_select %p124, %s125, %s126
      %p130 = pneg %p124
      %p131 = scmp.eq.s32.totalorder %s12, 1
      %p132 = por %p130, %p131
      %p133 = scmp.ne.s32.totalorder %s125, %s128
      %p134 = scmp.eq.s32.totalorder %s12, 0
      %p135 = por %p133, %p134
      %p136 = scmp.ne.s32.totalorder %s125, %s128
      %p137 = scmp.eq.s32.totalorder %s17, 1
      %p138 = por %p136, %p137
      %p139 = scmp.ne.s32.totalorder %s128, %s129
      %p140 = scmp.eq.s32.totalorder %s17, 0
      %p141 = por %p139, %p140
      %p142 = scmp.ne.s32.totalorder %s128, %s129
      %p143 = scmp.eq.s32.totalorder %s18, 1
      %p144 = por %p142, %p143
      %p146 = scmp.ne.s32.totalorder %s129, %s145
      %p147 = scmp.eq.s32.totalorder %s18, 0
      %p148 = por %p146, %p147
      %p149 = scmp.le.s32.totalorder 1, %s12
      %p150 = scmp.lt.s32.totalorder %s12, 3
      %p151 = pnand %p149, %p150
      %p152 = pneg %p151
      // Predicated region
      $region9: #{tpu_custom_call.1} parent=5 // pred_check
        _
      $region10: #{tpu_custom_call.1} parent=5 // pred_check_branch
        %154 = sbr.rel (%p151) target = $region12
      $region11: #{tpu_custom_call.1} parent=5 // pred_region
        %s155 = ssub.s32 %s12, 1
        // Predicated region
        $region13: #{tpu_custom_call.1} parent=11 // pred_check
          %p156 = pneg %p85
        $region14: #{tpu_custom_call.1} parent=11 // pred_check_branch
          %158 = sbr.rel (%p156) target = $region16
        $region15: #{tpu_custom_call.1} parent=11 // pred_region
          %p159 = scmp.lt.s32.totalorder %s23, 0
          %s160 = scalar_select %p159, %s23, 0
          %s161 = smul.addr %s160, 4
          %s162 = scalar_lea.vmem %s1, %s161
        $region16: #{tpu_custom_call.1} parent=11 // pred_fallthru
          _
        // Predicated region
        $region17: #{tpu_custom_call.1} parent=11 // pred_check
          %p163 = pneg %p111
        $region18: #{tpu_custom_call.1} parent=11 // pred_check_branch
          %165 = sbr.rel (%p163) target = $region20
        $region19: #{tpu_custom_call.1} parent=11 // pred_region
          %p166 = scmp.lt.s32.totalorder %s23, 0
          %s167 = scalar_select %p166, %s23, 0
          %s168 = scalar_lea.vmem %s2, %s167
        $region20: #{tpu_custom_call.1} parent=11 // pred_fallthru
          _
      $region12: #{tpu_custom_call.1} parent=5 // pred_fallthru
        _
      %p169 = scmp.lt.s32.totalorder %s12, 2
      // Predicated region
      $region21: #{tpu_custom_call.1} parent=5 // pred_check
        %p170 = pneg %p169
      $region22: #{tpu_custom_call.1} parent=5 // pred_check_branch
        %172 = sbr.rel (%p170) target = $region24
      $region23: #{tpu_custom_call.1} parent=5 // pred_region
        // Predicated region
        $region25: #{tpu_custom_call.1} parent=23 // pred_check
          %p173 = pneg %p53
        $region26: #{tpu_custom_call.1} parent=23 // pred_check_branch
          %175 = sbr.rel (%p173) target = $region28
        $region27: #{tpu_custom_call.1} parent=23 // pred_region
          %p176 = scmp.lt.s32.totalorder %s19, 1
          %s177 = scalar_select %p176, %s19, 1
          %p178 = scmp.lt.s32.totalorder %s21, 0
          %s179 = scalar_select %p178, %s21, 0
          %s180 = smul.addr %s179, 17
          %s181 = smul.addr %s177, 17
          %s182 = sadd.s32 %s180, %s181
          %s183 = smul.addr %s182, 4
          %s184 = scalar_lea.vmem %s0, %s183
        $region28: #{tpu_custom_call.1} parent=23 // pred_fallthru
          _
      $region24: #{tpu_custom_call.1} parent=5 // pred_fallthru
        _
      %p185 = scmp.le.s32.totalorder 1, %s12
      %p186 = scmp.lt.s32.totalorder %s12, 3
      %p187 = pnand %p185, %p186
      %p188 = pneg %p187
      // Predicated region
      $region29: #{tpu_custom_call.1} parent=5 // pred_check
        _
      $region30: #{tpu_custom_call.1} parent=5 // pred_check_branch
        %190 = sbr.rel (%p187) target = $region32
      $region31: #{tpu_custom_call.1} parent=5 // pred_region
        %s191 = ssub.s32 %s12, 1
        %p192 = scmp.lt.s32.totalorder %s22, 1
        %s193 = scalar_select %p192, %s22, 1
        %p194 = scmp.lt.s32.totalorder %s24, 0
        %s195 = scalar_select %p194, %s24, 0
        %s196 = smul.addr %s195, 17
        %s197 = smul.addr %s193, 17
        %s198 = sadd.s32 %s196, %s197
        %s199 = smul.addr %s198, 4
        %s200 = scalar_lea.vmem %s0, %s199
        %p201 = pneg %p59
        %p202 = pneg %p56
        %p203 = scmp.lt.s32.totalorder %s23, 0
        %s204 = scalar_select %p203, %s23, 0
        %s205 = smul.addr %s204, 4
        %s206 = scalar_lea.vmem %s1, %s205
        %p207 = pneg %p85
        %p208 = pneg %p82
        %p209 = scmp.lt.s32.totalorder %s23, 0
        %s210 = scalar_select %p209, %s23, 0
        %s211 = scalar_lea.vmem %s2, %s210
        %p212 = pneg %p111
        %p213 = pneg %p108
        %p214 = pneg %p141
        %p215 = pneg %p138
        %s216 = sand.u32 %s128, 1
        %s217 = scalar_lea.sflag [#allocation3], %s216
        %s218 = sand.u32 %s128, 1
        %s219 = smul.addr %s218, 128
        %s220 = scalar_lea.vmem [#allocation2], %s219
        %p221 = scmp.lt.s32.totalorder %s22, 1
        %s222 = scalar_select %p221, %s22, 1
        %p223 = scmp.lt.s32.totalorder %s24, 0
        %s224 = scalar_select %p223, %s24, 0
        %s225 = smul.addr %s224, 17
        %s226 = smul.addr %s222, 17
        %s227 = sadd.s32 %s225, %s226
        %s228 = smul.addr %s227, 4
        %s229 = scalar_lea.vmem %s0, %s228
        %p230 = scmp.lt.s32.totalorder %s23, 0
        %s231 = scalar_select %p230, %s23, 0
        %s232 = smul.addr %s231, 4
        %s233 = scalar_lea.vmem %s1, %s232
        %p234 = scmp.lt.s32.totalorder %s23, 0
        %s235 = scalar_select %p234, %s23, 0
        %s236 = scalar_lea.vmem %s2, %s235
        %s237 = smul.u32 16, %s24
        %v239 = vld [vmem:[%s229] sm:$0xf]
        %v240 = vld [vmem:[%s229 + $0x4] sm:$0xf]
        %v241 = vld [vmem:[%s229 + $0x8] sm:$0xf]
        %v242 = vld [vmem:[%s229 + $0xc] sm:$0xf]
        %v243 = vld [vmem:[%s229 + $0x10] sm:$0xf]
        %v244 = vld [vmem:[%s229 + $0x14] sm:$0xf]
        %v245 = vld [vmem:[%s229 + $0x18] sm:$0xf]
        %v246 = vld [vmem:[%s229 + $0x1c] sm:$0xf]
        %v247 = vld [vmem:[%s229 + $0x20] sm:$0xf]
        %v248 = vld [vmem:[%s229 + $0x24] sm:$0xf]
        %v249 = vld [vmem:[%s229 + $0x28] sm:$0xf]
        %v250 = vld [vmem:[%s229 + $0x2c] sm:$0xf]
        %v251 = vld [vmem:[%s229 + $0x30] sm:$0xf]
        %v252 = vld [vmem:[%s229 + $0x34] sm:$0xf]
        %v253 = vld [vmem:[%s229 + $0x38] sm:$0xf]
        %v254 = vld [vmem:[%s229 + $0x3c] sm:$0xf]
        %v255 = vld [vmem:[%s233] sm:$0xf]
        %v256 = vld [vmem:[%s233 + $0x4] sm:$0xf]
        %v257 = vld [vmem:[%s229 + $0x40] sm:$0x1]
        %s258 = scalar_lea.vmem %s233, 8
        %v259 = vld [vmem:[%s258] sm:$0xf]
        %v260 = vld [vmem:[%s258 + $0x4] sm:$0xf]
        %v278 = vunpack.c.l.b16 %v239
        %v279 = vunpack.c.l.b16 %v240
        %v280 = vunpack.c.l.b16 %v241
        %v281 = vunpack.c.l.b16 %v242
        %v282 = vunpack.c.l.b16 %v243
        %v283 = vunpack.c.l.b16 %v244
        %v284 = vunpack.c.l.b16 %v245
        %v285 = vunpack.c.l.b16 %v246
        %v286 = vunpack.c.l.b16 %v247
        %v287 = vunpack.c.l.b16 %v248
        %v288 = vunpack.c.l.b16 %v249
        %v289 = vunpack.c.l.b16 %v250
        %v290 = vunpack.c.l.b16 %v251
        %v291 = vunpack.c.l.b16 %v252
        %v292 = vunpack.c.l.b16 %v253
        %v293 = vunpack.c.l.b16 %v254
        %v294 = vunpack.c.l.b16 %v257
        %v295 = vpack.c.b16 %v279, %v278
        %v296 = vpack.c.b16 %v281, %v280
        %v297 = vpack.c.b16 %v283, %v282
        %v298 = vpack.c.b16 %v285, %v284
        %v299 = vpack.c.b16 %v287, %v286
        %v300 = vpack.c.b16 %v289, %v288
        %v301 = vpack.c.b16 %v291, %v290
        %v302 = vpack.c.b16 %v293, %v292
        %v303 = vpack.c.b16 %v294, %v294
        %vm304 = vsmask.f32 7424
        %v306 = vshrl.u32 %v295, 16
        %v308 = vshll.u32 %v295, 16
        %v310 = vrot.slane %v308, 1
        %v311 = vor.u32 %v306, %v310
        %v313 = vshll.u32 %v296, 16
        %v315 = vrot.slane %v313, 1
        %v316 = vsel %vm304, %v311, %v315
        %v317 = vshrl.u32 %v296, 16
        %v319 = vor.u32 %v317, %v315
        %v321 = vshll.u32 %v297, 16
        %v323 = vrot.slane %v321, 1
        %v324 = vsel %vm304, %v319, %v323
        %v325 = vshrl.u32 %v297, 16
        %v327 = vor.u32 %v325, %v323
        %v329 = vshll.u32 %v298, 16
        %v331 = vrot.slane %v329, 1
        %v332 = vsel %vm304, %v327, %v331
        %v333 = vshrl.u32 %v298, 16
        %v335 = vor.u32 %v333, %v331
        %v337 = vshll.u32 %v299, 16
        %v339 = vrot.slane %v337, 1
        %v340 = vsel %vm304, %v335, %v339
        %v341 = vshrl.u32 %v299, 16
        %v343 = vor.u32 %v341, %v339
        %v345 = vshll.u32 %v300, 16
        %v347 = vrot.slane %v345, 1
        %v348 = vsel %vm304, %v343, %v347
        %v349 = vshrl.u32 %v300, 16
        %v351 = vor.u32 %v349, %v347
        %v353 = vshll.u32 %v301, 16
        %v355 = vrot.slane %v353, 1
        %v356 = vsel %vm304, %v351, %v355
        %v357 = vshrl.u32 %v301, 16
        %v359 = vor.u32 %v357, %v355
        %v361 = vshll.u32 %v302, 16
        %v363 = vrot.slane %v361, 1
        %v364 = vsel %vm304, %v359, %v363
        %v365 = vshrl.u32 %v302, 16
        %v367 = vor.u32 %v365, %v363
        %v369 = vshll.u32 %v303, 16
        %v371 = vrot.slane %v369, 1
        %v372 = vsel %vm304, %v367, %v371
        %v375 = vunpack.c.l.b16 %v259
        %v376 = vunpack.c.l.b16 %v260
        %v377 = vpack.c.b16 %v376, %v375
        %vm379 = vcmask 130048
        %v381 = vsel %vm379, %v316, 0
        %v384 = vsel %vm379, %v324, 0
        %v387 = vsel %vm379, %v332, 0
        %v390 = vsel %vm379, %v340, 0
        %v393 = vsel %vm379, %v348, 0
        %v396 = vsel %vm379, %v356, 0
        %v399 = vsel %vm379, %v364, 0
        %v402 = vsel %vm379, %v372, 0
        %404 = vmatpush.bf16.msra.mxu0 0
        %405 = vmatpush.bf16.msra.mxu0 0
        %406 = vmatpush.bf16.msra.mxu0 0
        %407 = vmatpush.bf16.msra.mxu0 0
        %408 = vmatpush.bf16.msra.mxu0 0
        %409 = vmatpush.bf16.msra.mxu0 0
        %410 = vmatpush.bf16.msra.mxu0 0
        %411 = vmatpush.bf16.msra.mxu0 %v377
        %412 = vmatmul.bf16.gmra.mxu0 %v381
        %v413 = vpop.f32.mrf.mxu0
        %v414 = vadd.f32 0.0, %v413
        %v415 = vpop.f32.mrf.mxu0
        %v416 = vadd.f32 0.0, %v415
        %417 = vmatmul.bf16.gmra.mxu0 %v384
        %v418 = vpop.f32.mrf.mxu0
        %v419 = vadd.f32 0.0, %v418
        %v420 = vpop.f32.mrf.mxu0
        %v421 = vadd.f32 0.0, %v420
        %422 = vmatmul.bf16.gmra.mxu0 %v387
        %v423 = vpop.f32.mrf.mxu0
        %v424 = vadd.f32 0.0, %v423
        %v425 = vpop.f32.mrf.mxu0
        %v426 = vadd.f32 0.0, %v425
        %427 = vmatmul.bf16.gmra.mxu0 %v390
        %v428 = vpop.f32.mrf.mxu0
        %v429 = vadd.f32 0.0, %v428
        %v430 = vpop.f32.mrf.mxu0
        %v431 = vadd.f32 0.0, %v430
        %432 = vmatmul.bf16.gmra.mxu0 %v393
        %v433 = vpop.f32.mrf.mxu0
        %v434 = vadd.f32 0.0, %v433
        %v435 = vpop.f32.mrf.mxu0
        %v436 = vadd.f32 0.0, %v435
        %437 = vmatmul.bf16.gmra.mxu0 %v396
        %v438 = vpop.f32.mrf.mxu0
        %v439 = vadd.f32 0.0, %v438
        %v440 = vpop.f32.mrf.mxu0
        %v441 = vadd.f32 0.0, %v440
        %442 = vmatmul.bf16.gmra.mxu0 %v399
        %v443 = vpop.f32.mrf.mxu0
        %v444 = vadd.f32 0.0, %v443
        %v445 = vpop.f32.mrf.mxu0
        %v446 = vadd.f32 0.0, %v445
        %447 = vmatmul.bf16.gmra.mxu0 %v402
        %v448 = vpop.f32.mrf.mxu0
        %v449 = vadd.f32 0.0, %v448
        %v450 = vpop.f32.mrf.mxu0
        %v451 = vadd.f32 0.0, %v450
        %452 = vdwg.mxu0
        %v455 = vunpack.c.l.b16 %v255
        %v456 = vunpack.c.l.b16 %v256
        %v457 = vpack.c.b16 %v456, %v455
        %v459 = vsel %vm379, %v295, 0
        %v461 = vsel %vm379, %v296, 0
        %v463 = vsel %vm379, %v297, 0
        %v465 = vsel %vm379, %v298, 0
        %v467 = vsel %vm379, %v299, 0
        %v469 = vsel %vm379, %v300, 0
        %v471 = vsel %vm379, %v301, 0
        %v473 = vsel %vm379, %v302, 0
        %475 = vmatpush.bf16.msra.mxu0 0
        %476 = vmatpush.bf16.msra.mxu0 0
        %477 = vmatpush.bf16.msra.mxu0 0
        %478 = vmatpush.bf16.msra.mxu0 0
        %479 = vmatpush.bf16.msra.mxu0 0
        %480 = vmatpush.bf16.msra.mxu0 0
        %481 = vmatpush.bf16.msra.mxu0 0
        %482 = vmatpush.bf16.msra.mxu0 %v457
        %483 = vmatmul.bf16.gmra.mxu0 %v459
        %v484 = vpop.f32.mrf.mxu0
        %v485 = vadd.f32 %v414, %v484
        %v486 = vpop.f32.mrf.mxu0
        %v487 = vadd.f32 %v416, %v486
        %488 = vmatmul.bf16.gmra.mxu0 %v461
        %v489 = vpop.f32.mrf.mxu0
        %v490 = vadd.f32 %v419, %v489
        %v491 = vpop.f32.mrf.mxu0
        %v492 = vadd.f32 %v421, %v491
        %493 = vmatmul.bf16.gmra.mxu0 %v463
        %v494 = vpop.f32.mrf.mxu0
        %v495 = vadd.f32 %v424, %v494
        %v496 = vpop.f32.mrf.mxu0
        %v497 = vadd.f32 %v426, %v496
        %498 = vmatmul.bf16.gmra.mxu0 %v465
        %v499 = vpop.f32.mrf.mxu0
        %v500 = vadd.f32 %v429, %v499
        %v501 = vpop.f32.mrf.mxu0
        %v502 = vadd.f32 %v431, %v501
        %503 = vmatmul.bf16.gmra.mxu0 %v467
        %v504 = vpop.f32.mrf.mxu0
        %v505 = vadd.f32 %v434, %v504
        %v506 = vpop.f32.mrf.mxu0
        %v507 = vadd.f32 %v436, %v506
        %508 = vmatmul.bf16.gmra.mxu0 %v469
        %v509 = vpop.f32.mrf.mxu0
        %v510 = vadd.f32 %v439, %v509
        %v511 = vpop.f32.mrf.mxu0
        %v512 = vadd.f32 %v441, %v511
        %513 = vmatmul.bf16.gmra.mxu0 %v471
        %v514 = vpop.f32.mrf.mxu0
        %v515 = vadd.f32 %v444, %v514
        %v516 = vpop.f32.mrf.mxu0
        %v517 = vadd.f32 %v446, %v516
        %518 = vmatmul.bf16.gmra.mxu0 %v473
        %v519 = vpop.f32.mrf.mxu0
        %v520 = vadd.f32 %v449, %v519
        %v521 = vpop.f32.mrf.mxu0
        %v522 = vadd.f32 %v451, %v521
        %523 = vdwg.mxu0
        %v524 = vld [vmem:[%s236] sm:$0x1]
        %v526 = vperm.slane %v524, 0
        %v528 = vadd.f32 %v485, %v526
        %v529 = vadd.f32 %v487, %v526
        %v530 = vadd.f32 %v490, %v526
        %v531 = vadd.f32 %v492, %v526
        %v532 = vadd.f32 %v495, %v526
        %v533 = vadd.f32 %v497, %v526
        %v534 = vadd.f32 %v500, %v526
        %v535 = vadd.f32 %v502, %v526
        %v536 = vadd.f32 %v505, %v526
        %v537 = vadd.f32 %v507, %v526
        %v538 = vadd.f32 %v510, %v526
        %v539 = vadd.f32 %v512, %v526
        %v540 = vadd.f32 %v515, %v526
        %v541 = vadd.f32 %v517, %v526
        %v542 = vadd.f32 %v520, %v526
        %v543 = vadd.f32 %v522, %v526
        %544 = vst [vmem:[%s220] sm:$0xff] %v528
        %545 = vst [vmem:[%s220 + $0x8] sm:$0xff] %v529
        %546 = vst [vmem:[%s220 + $0x10] sm:$0xff] %v530
        %547 = vst [vmem:[%s220 + $0x18] sm:$0xff] %v531
        %548 = vst [vmem:[%s220 + $0x20] sm:$0xff] %v532
        %549 = vst [vmem:[%s220 + $0x28] sm:$0xff] %v533
        %550 = vst [vmem:[%s220 + $0x30] sm:$0xff] %v534
        %551 = vst [vmem:[%s220 + $0x38] sm:$0xff] %v535
        %552 = vst [vmem:[%s220 + $0x40] sm:$0xff] %v536
        %553 = vst [vmem:[%s220 + $0x48] sm:$0xff] %v537
        %554 = vst [vmem:[%s220 + $0x50] sm:$0xff] %v538
        %555 = vst [vmem:[%s220 + $0x58] sm:$0xff] %v539
        %556 = vst [vmem:[%s220 + $0x60] sm:$0xff] %v540
        %557 = vst [vmem:[%s220 + $0x68] sm:$0xff] %v541
        %558 = vst [vmem:[%s220 + $0x70] sm:$0xff] %v542
        %559 = vst [vmem:[%s220 + $0x78] sm:$0xff] %v543
        %s560 = sand.u32 %s128, 1
        %s561 = scalar_lea.sflag [#allocation3], %s560
        %s562 = sand.u32 %s128, 1
        %s563 = smul.addr %s562, 128
        %s564 = scalar_lea.vmem [#allocation2], %s563
        // Predicated region
        $region33: #{tpu_custom_call.1} parent=31 // pred_check
          %p565 = pneg %p138
        $region34: #{tpu_custom_call.1} parent=31 // pred_check_branch
          %567 = sbr.rel (%p565) target = $region36
        $region35: #{tpu_custom_call.1} parent=31 // pred_region
          %s568 = smul.u32 16, %s24
          %570 = vsyncadd %s561, 0
          %s571 = sadd.s32 %s23, %s568
          %s572 = smul.addr %s22, 16
          %s573 = sadd.s32 %s571, %s572
          %s574 = smul.addr %s573, 8
          %s575 = scalar_lea.hbm %s3, %s574
          %s576 = sshll.u32 %s564, 4
          %s577 = int_to_ptr.vmem [resolvable:$true] %s576
          %s578 = sshll.u32 %s575, 4
          %s579 = int_to_ptr.hbm [resolvable:$true] %s578
          %584 = dma.vmem_to_hbm [thread:$0]  %s577, 2048, %s579, %s561, 128, 128, 8
        $region36: #{tpu_custom_call.1} parent=31 // pred_fallthru
          _
      $region32: #{tpu_custom_call.1} parent=5 // pred_fallthru
        _
      %p585 = scmp.le.s32.totalorder 2, %s12
      // Predicated region
      $region37: #{tpu_custom_call.1} parent=5 // pred_check
        %p586 = pneg %p585
      $region38: #{tpu_custom_call.1} parent=5 // pred_check_branch
        %588 = sbr.rel (%p586) target = $region40
      $region39: #{tpu_custom_call.1} parent=5 // pred_region
        %s589 = ssub.s32 %s12, 2
        // Predicated region
        $region41: #{tpu_custom_call.1} parent=39 // pred_check
          %p590 = pneg %p144
        $region42: #{tpu_custom_call.1} parent=39 // pred_check_branch
          %592 = sbr.rel (%p590) target = $region44
        $region43: #{tpu_custom_call.1} parent=39 // pred_region
          %s593 = sand.u32 %s129, 1
          %s594 = scalar_lea.sflag [#allocation3], %s593
          %s595 = sand.u32 %s129, 1
          %s596 = smul.addr %s595, 128
          %s597 = scalar_lea.vmem [#allocation2], %s596
          %599 = dma.done %s594, 2048
        $region44: #{tpu_custom_call.1} parent=39 // pred_fallthru
          _
      $region40: #{tpu_custom_call.1} parent=5 // pred_fallthru
        _
    $region6: #{tpu_custom_call.1} parent=1 // loop_footer
      %s16 = sadd.s32 1, %s12
    $region7: #{tpu_custom_call.1} parent=1 // loop_footer_branch
      %11 = sbr.rel target = $region3
    $region8: #{tpu_custom_call.1} parent=1 // loop_exit
      _
    %600 = vsyncpa [#allocation3], 1
    %s601 = scalar_lea.sflag [#allocation3], 1
    %602 = vsyncpa %s601, 1

</llo_original>
